<compile_context>
chip_gen: v7x
topology: tpu7x:2x2x1
jax: 0.10.0
libtpu: 0.0.40
codegen_flags: <defaults>
</compile_context>

<pallas_src>
import functools

import jax
import jax.numpy as jnp
from jax.experimental import pallas as pl
from jax.experimental.pallas import tpu as pltpu

LN_EPS = 1e-12                 # BertConfig default layer_norm_eps
INV_SQRT2 = 0.7071067811865476


# ----------------------------------------------------------------------------
# Generation-aware VMEM budget / tile targets
# ----------------------------------------------------------------------------
def _vmem_capacity_bytes():
    try:
        cap = getattr(pltpu.get_tpu_info(), "vmem_capacity_bytes", None)
        if cap:
            return int(cap)
    except Exception:
        pass
    return 64 * 1024 * 1024            # conservative default (v7x-sized)


_VMEM_CAP = _vmem_capacity_bytes()
VMEM_LIMIT = min(int(_VMEM_CAP * 0.80), 100 * 1024 * 1024)
# Big row tiles on 128 MiB parts (v5e/v6e); capped for v7x's 64 MiB VMEM.
ROW_TILE_TARGET = 1024 if _VMEM_CAP >= 100 * 1024 * 1024 else 512
FFN_CHUNK_TARGET = 512                 # intermediate-axis chunk streamed in VMEM
ATTN_Q_TILE_TARGET = 256               # query-row tile (>=2 blocks at S=512)


def _tile(dim, target, align):
    """Largest tile <= target that divides dim, preferring multiples of align."""
    if dim <= target:
        return dim
    t = target - (target % align)
    while t >= align:
        if dim % t == 0:
            return t
        t -= align
    for t in range(min(target, dim), 0, -1):
        if dim % t == 0:
            return t
    return dim


def _mosaic(dims):
    return pltpu.CompilerParams(dimension_semantics=dims,
                                vmem_limit_bytes=VMEM_LIMIT)


# ----------------------------------------------------------------------------
# Pallas kernels
# ----------------------------------------------------------------------------
def _layernorm_kernel(x_ref, g_ref, b_ref, o_ref, *, eps):
    """y = LayerNorm(x) * gamma + beta (f32 stats, bf16 out)."""
    h = x_ref[...].astype(jnp.float32)
    mu = jnp.mean(h, axis=-1, keepdims=True)
    var = jnp.mean(jnp.square(h - mu), axis=-1, keepdims=True)
    y = (h - mu) * jax.lax.rsqrt(var + eps) * g_ref[...] + b_ref[...]
    o_ref[...] = y.astype(o_ref.dtype)


def _qkv_kernel(x_ref, w_ref, b_ref, o_ref, *, hidden):
    """Fused Q/K/V projection against one resident (H, 3H) weight slab.

    Writes a (3, tm, H) output block (three full-H lane-dense stores) so the
    attention kernel can address q / k / v as leading-axis planes.
    """
    y = jnp.dot(x_ref[...], w_ref[...], preferred_element_type=jnp.float32)
    y = (y + b_ref[...]).astype(o_ref.dtype)               # (tm, 3H) bf16
    o_ref[0] = y[:, :hidden]
    o_ref[1] = y[:, hidden:2 * hidden]
    o_ref[2] = y[:, 2 * hidden:]


def _proj_res_ln_kernel(x_ref, w_ref, b_ref, res_ref, g_ref, beta_ref, o_ref,
                        *, eps):
    """y = LayerNorm(x @ W + b + residual) * gamma + beta.

    K = H fits one tile, so there is no reduction grid axis and no f32
    accumulator scratch (single-step elision).
    """
    y = jnp.dot(x_ref[...], w_ref[...], preferred_element_type=jnp.float32)
    y = y + b_ref[...] + res_ref[...].astype(jnp.float32)
    mu = jnp.mean(y, axis=-1, keepdims=True)
    var = jnp.mean(jnp.square(y - mu), axis=-1, keepdims=True)
    o_ref[...] = ((y - mu) * jax.lax.rsqrt(var + eps) * g_ref[...]
                  + beta_ref[...]).astype(o_ref.dtype)


def _ffn_kernel(x_ref, wi_ref, bi_ref, wo_ref, bo_ref, g_ref, beta_ref,
                o_ref, *acc_refs, eps, chunk):
    """Fused FFN: LayerNorm(GELU(x@Wi + bi) @ Wo + bo + x) * gamma + beta.

    Wi / Wo are fully resident in VMEM (constant index_map, one DMA per
    layer); the intermediate is processed `chunk` lanes at a time so the
    4x-wide activation never hits HBM.  x_ref doubles as the residual.
    """
    inter = wi_ref.shape[1]
    n_chunks = inter // chunk

    if n_chunks == 1:                       # demo / tiny configs: no scratch
        h = jnp.dot(x_ref[...], wi_ref[...],
                    preferred_element_type=jnp.float32) + bi_ref[...]
        h = 0.5 * h * (1.0 + jax.lax.erf(h * INV_SQRT2))    # exact erf GELU
        y = jnp.dot(h.astype(jnp.bfloat16), wo_ref[...],
                    preferred_element_type=jnp.float32)
    else:
        acc_ref = acc_refs[0]
        acc_ref[...] = jnp.zeros_like(acc_ref)
        for c in range(n_chunks):           # static, unrolled (LLO visibility)
            lo, hi = c * chunk, (c + 1) * chunk
            h = jnp.dot(x_ref[...], wi_ref[:, lo:hi],
                        preferred_element_type=jnp.float32) + bi_ref[:, lo:hi]
            h = 0.5 * h * (1.0 + jax.lax.erf(h * INV_SQRT2))
            acc_ref[...] += jnp.dot(h.astype(jnp.bfloat16), wo_ref[lo:hi, :],
                                    preferred_element_type=jnp.float32)
        y = acc_ref[...]

    y = y + bo_ref[...] + x_ref[...].astype(jnp.float32)
    mu = jnp.mean(y, axis=-1, keepdims=True)
    var = jnp.mean(jnp.square(y - mu), axis=-1, keepdims=True)
    o_ref[...] = ((y - mu) * jax.lax.rsqrt(var + eps) * g_ref[...]
                  + beta_ref[...]).astype(o_ref.dtype)


def _attention_kernel(q_ref, k_ref, v_ref, bias_ref, o_ref, *, num_heads):
    """All heads for one (batch, q-tile) block.

    Softmax scale is already folded into Wq/bq, so q is read directly in bf16.
    Normalization happens after the PV matmul (scales (tq, dH), not (tq, S)),
    and heads are concatenated in-register so the output is one lane-dense
    (tq, H) store.
    """
    qb = q_ref[0, 0]                       # (tq, H) bf16 (pre-scaled)
    kb = k_ref[0, 0]                       # (S,  H) bf16
    vb = v_ref[0, 0]                       # (S,  H) bf16
    bias = bias_ref[0]                     # (1,  S) f32 additive mask
    H = qb.shape[-1]
    dH = H // num_heads

    ctxs = []
    for h in range(num_heads):
        sl = slice(h * dH, (h + 1) * dH)
        s = jax.lax.dot_general(qb[:, sl], kb[:, sl], (((1,), (1,)), ((), ())),
                                preferred_element_type=jnp.float32)   # (tq, S)
        s = s + bias
        m = jnp.max(s, axis=-1, keepdims=True)
        p = jnp.exp(s - m)
        l = jnp.sum(p, axis=-1, keepdims=True)                        # (tq, 1)
        ctx = jnp.dot(p.astype(jnp.bfloat16), vb[:, sl],
                      preferred_element_type=jnp.float32)             # (tq, dH)
        ctxs.append((ctx * pl.reciprocal(l, approx=True)).astype(jnp.bfloat16))
    o_ref[0] = jnp.concatenate(ctxs, axis=-1)   # single full-width store


# ----------------------------------------------------------------------------
# Thin wrappers around pallas_call
# ----------------------------------------------------------------------------
def layernorm(x, gamma, beta):
    M, H = x.shape
    tm = _tile(M, ROW_TILE_TARGET, 8)
    return pl.pallas_call(
        functools.partial(_layernorm_kernel, eps=LN_EPS),
        grid=(M // tm,),
        in_specs=[pl.BlockSpec((tm, H), lambda m: (m, 0)),
                  pl.BlockSpec((1, H), lambda m: (0, 0)),
                  pl.BlockSpec((1, H), lambda m: (0, 0))],
        out_specs=pl.BlockSpec((tm, H), lambda m: (m, 0)),
        out_shape=jax.ShapeDtypeStruct((M, H), jnp.bfloat16),
        compiler_params=_mosaic(("parallel",)),
    )(x, gamma, beta)


def qkv_linear(x, w, b):
    """x:(M,H) bf16, w:(H,3H) bf16 resident, b:(1,3H) f32 -> (3, M, H) bf16."""
    M, H = x.shape
    tm = _tile(M, ROW_TILE_TARGET, 8)
    return pl.pallas_call(
        functools.partial(_qkv_kernel, hidden=H),
        grid=(M // tm,),
        in_specs=[pl.BlockSpec((tm, H), lambda m: (m, 0)),
                  pl.BlockSpec((H, 3 * H), lambda m: (0, 0)),   # resident
                  pl.BlockSpec((1, 3 * H), lambda m: (0, 0))],
        out_specs=pl.BlockSpec((3, tm, H), lambda m: (0, m, 0)),
        out_shape=jax.ShapeDtypeStruct((3, M, H), jnp.bfloat16),
        compiler_params=_mosaic(("parallel",)),
    )(x, w, b)


def proj_res_ln(x, w, b, res, gamma, beta):
    """LayerNorm(x @ W + b + res); resident weight, no reduction axis/scratch."""
    M, K = x.shape
    H = w.shape[1]
    tm = _tile(M, ROW_TILE_TARGET, 8)
    return pl.pallas_call(
        functools.partial(_proj_res_ln_kernel, eps=LN_EPS),
        grid=(M // tm,),
        in_specs=[pl.BlockSpec((tm, K), lambda m: (m, 0)),
                  pl.BlockSpec((K, H), lambda m: (0, 0)),        # resident
                  pl.BlockSpec((1, H), lambda m: (0, 0)),
                  pl.BlockSpec((tm, H), lambda m: (m, 0)),
                  pl.BlockSpec((1, H), lambda m: (0, 0)),
                  pl.BlockSpec((1, H), lambda m: (0, 0))],
        out_specs=pl.BlockSpec((tm, H), lambda m: (m, 0)),
        out_shape=jax.ShapeDtypeStruct((M, H), jnp.bfloat16),
        compiler_params=_mosaic(("parallel",)),
    )(x, w, b, res, gamma, beta)


def ffn_res_ln(x, wi, bi, wo, bo, gamma, beta):
    """Fused FFN + residual + LayerNorm with fully-resident Wi/Wo."""
    M, H = x.shape
    inter = wi.shape[1]
    tm = _tile(M, ROW_TILE_TARGET, 8)
    ti = _tile(inter, FFN_CHUNK_TARGET, 128)
    scratch = ([pltpu.VMEM((tm, H), jnp.float32)] if inter // ti > 1 else [])
    return pl.pallas_call(
        functools.partial(_ffn_kernel, eps=LN_EPS, chunk=ti),
        grid=(M // tm,),
        in_specs=[pl.BlockSpec((tm, H), lambda m: (m, 0)),
                  pl.BlockSpec((H, inter), lambda m: (0, 0)),    # Wi resident
                  pl.BlockSpec((1, inter), lambda m: (0, 0)),
                  pl.BlockSpec((inter, H), lambda m: (0, 0)),    # Wo resident
                  pl.BlockSpec((1, H), lambda m: (0, 0)),
                  pl.BlockSpec((1, H), lambda m: (0, 0)),
                  pl.BlockSpec((1, H), lambda m: (0, 0))],
        out_specs=pl.BlockSpec((tm, H), lambda m: (m, 0)),
        out_shape=jax.ShapeDtypeStruct((M, H), jnp.bfloat16),
        scratch_shapes=scratch,
        compiler_params=_mosaic(("parallel",)),
    )(x, wi, bi, wo, bo, gamma, beta)


def mha(qkv, bias, *, num_heads):
    """qkv:(3,B,S,H) bf16 (scale pre-folded), bias:(B,1,S) f32 -> (B,S,H) bf16."""
    _, B, S, H = qkv.shape
    tq = _tile(S, ATTN_Q_TILE_TARGET, 8)
    return pl.pallas_call(
        functools.partial(_attention_kernel, num_heads=num_heads),
        grid=(B, S // tq),
        in_specs=[pl.BlockSpec((1, 1, tq, H), lambda b, qi: (0, b, qi, 0)),  # q
                  pl.BlockSpec((1, 1, S, H), lambda b, qi: (1, b, 0, 0)),    # k
                  pl.BlockSpec((1, 1, S, H), lambda b, qi: (2, b, 0, 0)),    # v
                  pl.BlockSpec((1, 1, S), lambda b, qi: (b, 0, 0))],
        out_specs=pl.BlockSpec((1, tq, H), lambda b, qi: (b, qi, 0)),
        out_shape=jax.ShapeDtypeStruct((B, S, H), jnp.bfloat16),
        compiler_params=_mosaic(("parallel", "parallel")),
    )(qkv, qkv, qkv, bias)


# ----------------------------------------------------------------------------
# Parameter init (deterministic, synthetic; N(0, 0.02) like BERT init)
# ----------------------------------------------------------------------------
def init_params(key, cfg):
    H, inter = cfg["hidden"], cfg["intermediate"]
    vocab = (cfg["num_ages"] + cfg["num_genders"] + cfg["num_ethnicities"]
             + cfg["num_insurances"] + 2)
    keys = iter(jax.random.split(key, 512))

    def nrm(shape, dtype=jnp.bfloat16):
        return (0.02 * jax.random.normal(next(keys), shape)).astype(dtype)

    params = {
        "word_emb": nrm((vocab, H), jnp.float32),
        "pos_emb": nrm((cfg["max_pos"], H), jnp.float32),
        "tok_emb": nrm((2, H), jnp.float32),
        "emb_ln_g": jnp.ones((1, H), jnp.float32),
        "emb_ln_b": jnp.zeros((1, H), jnp.float32),
        "age_emb": nrm((cfg["num_ages"], H), jnp.float32),
        "gender_emb": nrm((cfg["num_genders"], H), jnp.float32),
        "eth_emb": nrm((cfg["num_ethnicities"], H), jnp.float32),
        "ins_emb": nrm((cfg["num_insurances"], H), jnp.float32),
        "layers": [],
    }
    for _ in range(cfg["layers"]):
        params["layers"].append({
            # fused q/k/v projection as one (H, 3H) slab (q | k | v columns)
            "wqkv": nrm((H, 3 * H)),
            "bqkv": jnp.zeros((1, 3 * H), jnp.float32),
            "wo": nrm((H, H)), "bo": jnp.zeros((1, H), jnp.float32),
            "ln1_g": jnp.ones((1, H), jnp.float32),
            "ln1_b": jnp.zeros((1, H), jnp.float32),
            "wi": nrm((H, inter)), "bi": jnp.zeros((1, inter), jnp.float32),
            "wo2": nrm((inter, H)), "bo2": jnp.zeros((1, H), jnp.float32),
            "ln2_g": jnp.ones((1, H), jnp.float32),
            "ln2_b": jnp.zeros((1, H), jnp.float32),
        })
    return params


# ----------------------------------------------------------------------------
# Forward pass (mirrors BEHRTModel_Demo.forward, inference semantics)
# ----------------------------------------------------------------------------
def behrt_forward(params, input_ids, attention_mask, age_ids, gender_ids,
                  ethnicity_ids, insurance_ids, *, cfg):
    B, S = input_ids.shape
    H, nH = cfg["hidden"], cfg["heads"]
    dH = H // nH
    M = B * S

    # torch.clamp on the demographic ids
    age_ids = jnp.clip(age_ids, 0, cfg["num_ages"] - 1)
    gender_ids = jnp.clip(gender_ids, 0, cfg["num_genders"] - 1)
    ethnicity_ids = jnp.clip(ethnicity_ids, 0, cfg["num_ethnicities"] - 1)
    insurance_ids = jnp.clip(insurance_ids, 0, cfg["num_insurances"] - 1)

    # BERT embeddings: word + position + token-type(=0), then LayerNorm kernel
    pos_ids = jnp.arange(S, dtype=jnp.int32)
    emb = (params["word_emb"][input_ids]
           + params["pos_emb"][pos_ids][None, :, :]
           + params["tok_emb"][0][None, None, :])
    x = layernorm(emb.reshape(M, H), params["emb_ln_g"], params["emb_ln_b"])

    # HF-style additive extended attention mask, kept in f32
    bias = ((1.0 - attention_mask.astype(jnp.float32)) * -10000.0).reshape(B, 1, S)

    # Fold the softmax scale into the Q columns of W_qkv AND b_qkv (cheap,
    # removes the f32 q materialization inside the attention kernel).
    scale = 1.0 / float(dH) ** 0.5
    col_scale = jnp.concatenate([jnp.full((H,), scale, jnp.float32),
                                 jnp.ones((2 * H,), jnp.float32)])

    for lp in params["layers"]:
        wqkv = (lp["wqkv"].astype(jnp.float32) * col_scale).astype(jnp.bfloat16)
        bqkv = lp["bqkv"] * col_scale
        qkv = qkv_linear(x, wqkv, bqkv)                       # (3, M, H) bf16
        ctx = mha(qkv.reshape(3, B, S, H), bias, num_heads=nH)  # (B, S, H)
        x = proj_res_ln(ctx.reshape(M, H), lp["wo"], lp["bo"],
                        x, lp["ln1_g"], lp["ln1_b"])          # attn out + LN
        x = ffn_res_ln(x, lp["wi"], lp["bi"], lp["wo2"], lp["bo2"],
                       lp["ln2_g"], lp["ln2_b"])              # FFN + LN

    cls_token = x.reshape(B, S, H)[:, 0, :].astype(jnp.float32)

    # tiny B x H combine: cheaper in plain JAX than a kernel launch
    extra = (params["age_emb"][age_ids] + params["gender_emb"][gender_ids]
             + params["eth_emb"][ethnicity_ids]
             + params["ins_emb"][insurance_ids]) / 4.0
    return cls_token + extra


# ----------------------------------------------------------------------------
if __name__ == "__main__":
    # Scaled-down demo config (real module: hidden=768, 12 layers, 12 heads,
    # intermediate=3072, max_position_embeddings=512 — identical kernel
    # structure; the generation-aware tiling helpers pick production-sized
    # blocks automatically there).
    cfg = dict(num_ages=12, num_genders=2, num_ethnicities=5, num_insurances=4,
               hidden=32, heads=4, intermediate=128, layers=2, max_pos=64)

    key = jax.random.PRNGKey(0)
    k_par, k_ids, k_age, k_gen, k_eth, k_ins = jax.random.split(key, 6)
    params = init_params(k_par, cfg)

    B, S = 2, 8
    vocab = (cfg["num_ages"] + cfg["num_genders"] + cfg["num_ethnicities"]
             + cfg["num_insurances"] + 2)
    input_ids = jax.random.randint(k_ids, (B, S), 0, vocab, dtype=jnp.int32)
    attention_mask = jnp.ones((B, S), dtype=jnp.int32).at[1, -2:].set(0)
    # age ids deliberately drawn past the table size to exercise the clamp
    age_ids = jax.random.randint(k_age, (B,), 0, cfg["num_ages"] + 5, dtype=jnp.int32)
    gender_ids = jax.random.randint(k_gen, (B,), 0, cfg["num_genders"], dtype=jnp.int32)
    ethnicity_ids = jax.random.randint(k_eth, (B,), 0, cfg["num_ethnicities"], dtype=jnp.int32)
    insurance_ids = jax.random.randint(k_ins, (B,), 0, cfg["num_insurances"], dtype=jnp.int32)

    fwd = jax.jit(functools.partial(behrt_forward, cfg=cfg))
    out = fwd(params, input_ids, attention_mask, age_ids, gender_ids,
              ethnicity_ids, insurance_ids)
    jax.block_until_ready(out)

    assert out.shape == (B, cfg["hidden"]) and out.dtype == jnp.float32
    assert bool(jnp.all(jnp.isfinite(out)))
    print("KERNEL_OK")
</pallas_src>

<mosaic_0001>
module attributes {stable_mosaic.version = 11 : i64} {
  func.func @_layernorm_kernel(%arg0: i32, %arg1: memref<16x32xf32, #tpu.memory_space<vmem>>, %arg2: memref<1x32xf32, #tpu.memory_space<vmem>>, %arg3: memref<1x32xf32, #tpu.memory_space<vmem>>, %arg4: memref<16x32xbf16, #tpu.memory_space<vmem>>) attributes {dimension_semantics = [#tpu.dimension_semantics<parallel>], iteration_bounds = array<i64: 1>, scalar_prefetch = 0 : i64, scratch_operands = 0 : i64, tpu.core_type = #tpu.core_type<tc>, window_params = [{transform_indices = @transform_0, window_bounds = array<i64: 16, 32>}, {pipeline_mode = #tpu.pipeline_mode<synchronous>, transform_indices = @transform_1, window_bounds = array<i64: 1, 32>}, {pipeline_mode = #tpu.pipeline_mode<synchronous>, transform_indices = @transform_2, window_bounds = array<i64: 1, 32>}, {transform_indices = @transform_3, window_bounds = array<i64: 16, 32>}]} {
    %c0 = arith.constant 0 : index
    %c0_0 = arith.constant 0 : index
    %0 = vector.load %arg1[%c0, %c0_0] : memref<16x32xf32, #tpu.memory_space<vmem>>, vector<16x32xf32>
    %cst = arith.constant dense<0.000000e+00> : vector<16xf32>
    %1 = vector.multi_reduction <add>, %0, %cst [1] : vector<16x32xf32> to vector<16xf32>
    %2 = vector.shape_cast %1 : vector<16xf32> to vector<16x1xf32>
    %cst_1 = arith.constant 3.200000e+01 : f32
    %3 = vector.broadcast %cst_1 : f32 to vector<16x1xf32>
    %4 = arith.divf %2, %3 : vector<16x1xf32>
    %5 = vector.broadcast %4 : vector<16x1xf32> to vector<16x32xf32>
    %6 = arith.subf %0, %5 : vector<16x32xf32>
    %7 = arith.mulf %6, %6 : vector<16x32xf32>
    %cst_2 = arith.constant dense<0.000000e+00> : vector<16xf32>
    %8 = vector.multi_reduction <add>, %7, %cst_2 [1] : vector<16x32xf32> to vector<16xf32>
    %9 = vector.shape_cast %8 : vector<16xf32> to vector<16x1xf32>
    %cst_3 = arith.constant 3.200000e+01 : f32
    %10 = vector.broadcast %cst_3 : f32 to vector<16x1xf32>
    %11 = arith.divf %9, %10 : vector<16x1xf32>
    %12 = vector.broadcast %4 : vector<16x1xf32> to vector<16x32xf32>
    %13 = arith.subf %0, %12 : vector<16x32xf32>
    %cst_4 = arith.constant 9.99999996E-13 : f32
    %14 = vector.broadcast %cst_4 : f32 to vector<16x1xf32>
    %15 = arith.addf %11, %14 : vector<16x1xf32>
    %16 = math.rsqrt %15 : vector<16x1xf32>
    %17 = vector.broadcast %16 : vector<16x1xf32> to vector<16x32xf32>
    %18 = arith.mulf %13, %17 : vector<16x32xf32>
    %c0_5 = arith.constant 0 : index
    %c0_6 = arith.constant 0 : index
    %19 = vector.load %arg2[%c0_5, %c0_6] : memref<1x32xf32, #tpu.memory_space<vmem>>, vector<1x32xf32>
    %20 = vector.broadcast %19 : vector<1x32xf32> to vector<16x32xf32>
    %21 = arith.mulf %18, %20 : vector<16x32xf32>
    %c0_7 = arith.constant 0 : index
    %c0_8 = arith.constant 0 : index
    %22 = vector.load %arg3[%c0_7, %c0_8] : memref<1x32xf32, #tpu.memory_space<vmem>>, vector<1x32xf32>
    %23 = vector.broadcast %22 : vector<1x32xf32> to vector<16x32xf32>
    %24 = arith.addf %21, %23 : vector<16x32xf32>
    %25 = arith.truncf %24 : vector<16x32xf32> to vector<16x32xbf16>
    %c0_9 = arith.constant 0 : index
    %c0_10 = arith.constant 0 : index
    %26 = vector.load %arg4[%c0_9, %c0_10] : memref<16x32xbf16, #tpu.memory_space<vmem>>, vector<16x32xbf16>
    tpu.vector_store %arg4[%c0_9, %c0_10], %25 {strides = array<i32>} : memref<16x32xbf16, #tpu.memory_space<vmem>>, vector<16x32xbf16>,
    return
  }
  func.func @transform_0(%arg0: i32) -> (i32, i32) {
    %c0_i32 = arith.constant 0 : i32
    %c0_i32_0 = arith.constant 0 : i32
    return %arg0, %c0_i32 : i32, i32
  }
  func.func @transform_1(%arg0: i32) -> (i32, i32) {
    %c0_i32 = arith.constant 0 : i32
    %c0_i32_0 = arith.constant 0 : i32
    %c0_i32_1 = arith.constant 0 : i32
    return %c0_i32, %c0_i32_0 : i32, i32
  }
  func.func @transform_2(%arg0: i32) -> (i32, i32) {
    %c0_i32 = arith.constant 0 : i32
    %c0_i32_0 = arith.constant 0 : i32
    %c0_i32_1 = arith.constant 0 : i32
    return %c0_i32, %c0_i32_0 : i32, i32
  }
  func.func @transform_3(%arg0: i32) -> (i32, i32) {
    %c0_i32 = arith.constant 0 : i32
    %c0_i32_0 = arith.constant 0 : i32
    return %arg0, %c0_i32 : i32, i32
  }
}

module attributes {stable_mosaic.version = 11 : i64} {
  func.func @_qkv_kernel(%arg0: i32, %arg1: memref<16x32xbf16, #tpu.memory_space<vmem>>, %arg2: memref<32x96xbf16, #tpu.memory_space<vmem>>, %arg3: memref<1x96xf32, #tpu.memory_space<vmem>>, %arg4: memref<3x16x32xbf16, #tpu.memory_space<vmem>>) attributes {dimension_semantics = [#tpu.dimension_semantics<parallel>], iteration_bounds = array<i64: 1>, scalar_prefetch = 0 : i64, scratch_operands = 0 : i64, tpu.core_type = #tpu.core_type<tc>, window_params = [{transform_indices = @transform_0, window_bounds = array<i64: 16, 32>}, {pipeline_mode = #tpu.pipeline_mode<synchronous>, transform_indices = @transform_1, window_bounds = array<i64: 32, 96>}, {pipeline_mode = #tpu.pipeline_mode<synchronous>, transform_indices = @transform_2, window_bounds = array<i64: 1, 96>}, {transform_indices = @transform_3, window_bounds = array<i64: 3, 16, 32>}]} {
    %c0 = arith.constant 0 : index
    %c0_0 = arith.constant 0 : index
    %0 = vector.load %arg1[%c0, %c0_0] : memref<16x32xbf16, #tpu.memory_space<vmem>>, vector<16x32xbf16>
    %c0_1 = arith.constant 0 : index
    %c0_2 = arith.constant 0 : index
    %1 = vector.load %arg2[%c0_1, %c0_2] : memref<32x96xbf16, #tpu.memory_space<vmem>>, vector<32x96xbf16>
    %cst = arith.constant dense<0.000000e+00> : vector<16x96xf32>
    %2 = tpu.matmul %0, %1, %cst {dimension_numbers = #tpu.dot_dimension_numbers<[1], [0], [0], [1], [0, 0, 1, 1], [], []>} : vector<16x32xbf16>, vector<32x96xbf16>, vector<16x96xf32> -> vector<16x96xf32>
    %c0_3 = arith.constant 0 : index
    %c0_4 = arith.constant 0 : index
    %3 = vector.load %arg3[%c0_3, %c0_4] : memref<1x96xf32, #tpu.memory_space<vmem>>, vector<1x96xf32>
    %4 = vector.broadcast %3 : vector<1x96xf32> to vector<16x96xf32>
    %5 = arith.addf %2, %4 : vector<16x96xf32>
    %6 = arith.truncf %5 : vector<16x96xf32> to vector<16x96xbf16>
    %7 = vector.extract_strided_slice %6 {offsets = [0, 0], sizes = [16, 32], strides = [1, 1]} : vector<16x96xbf16> to vector<16x32xbf16>
    %c0_5 = arith.constant 0 : index
    %c0_6 = arith.constant 0 : index
    %c0_7 = arith.constant 0 : index
    %8 = vector.load %arg4[%c0_5, %c0_6, %c0_7] : memref<3x16x32xbf16, #tpu.memory_space<vmem>>, vector<1x16x32xbf16>
    %9 = vector.shape_cast %8 : vector<1x16x32xbf16> to vector<16x32xbf16>
    %10 = vector.shape_cast %7 : vector<16x32xbf16> to vector<1x16x32xbf16>
    tpu.vector_store %arg4[%c0_5, %c0_6, %c0_7], %10 {strides = array<i32>} : memref<3x16x32xbf16, #tpu.memory_space<vmem>>, vector<1x16x32xbf16>,
    %11 = vector.extract_strided_slice %6 {offsets = [0, 32], sizes = [16, 32], strides = [1, 1]} : vector<16x96xbf16> to vector<16x32xbf16>
    %c1 = arith.constant 1 : index
    %c0_8 = arith.constant 0 : index
    %c0_9 = arith.constant 0 : index
    %12 = vector.load %arg4[%c1, %c0_8, %c0_9] : memref<3x16x32xbf16, #tpu.memory_space<vmem>>, vector<1x16x32xbf16>
    %13 = vector.shape_cast %12 : vector<1x16x32xbf16> to vector<16x32xbf16>
    %14 = vector.shape_cast %11 : vector<16x32xbf16> to vector<1x16x32xbf16>
    tpu.vector_store %arg4[%c1, %c0_8, %c0_9], %14 {strides = array<i32>} : memref<3x16x32xbf16, #tpu.memory_space<vmem>>, vector<1x16x32xbf16>,
    %15 = vector.extract_strided_slice %6 {offsets = [0, 64], sizes = [16, 32], strides = [1, 1]} : vector<16x96xbf16> to vector<16x32xbf16>
    %c2 = arith.constant 2 : index
    %c0_10 = arith.constant 0 : index
    %c0_11 = arith.constant 0 : index
    %16 = vector.load %arg4[%c2, %c0_10, %c0_11] : memref<3x16x32xbf16, #tpu.memory_space<vmem>>, vector<1x16x32xbf16>
    %17 = vector.shape_cast %16 : vector<1x16x32xbf16> to vector<16x32xbf16>
    %18 = vector.shape_cast %15 : vector<16x32xbf16> to vector<1x16x32xbf16>
    tpu.vector_store %arg4[%c2, %c0_10, %c0_11], %18 {strides = array<i32>} : memref<3x16x32xbf16, #tpu.memory_space<vmem>>, vector<1x16x32xbf16>,
    return
  }
  func.func @transform_0(%arg0: i32) -> (i32, i32) {
    %c0_i32 = arith.constant 0 : i32
    %c0_i32_0 = arith.constant 0 : i32
    return %arg0, %c0_i32 : i32, i32
  }
  func.func @transform_1(%arg0: i32) -> (i32, i32) {
    %c0_i32 = arith.constant 0 : i32
    %c0_i32_0 = arith.constant 0 : i32
    %c0_i32_1 = arith.constant 0 : i32
    return %c0_i32, %c0_i32_0 : i32, i32
  }
  func.func @transform_2(%arg0: i32) -> (i32, i32) {
    %c0_i32 = arith.constant 0 : i32
    %c0_i32_0 = arith.constant 0 : i32
    %c0_i32_1 = arith.constant 0 : i32
    return %c0_i32, %c0_i32_0 : i32, i32
  }
  func.func @transform_3(%arg0: i32) -> (i32, i32, i32) {
    %c0_i32 = arith.constant 0 : i32
    %c0_i32_0 = arith.constant 0 : i32
    %c0_i32_1 = arith.constant 0 : i32
    return %c0_i32, %arg0, %c0_i32_0 : i32, i32, i32
  }
}

module attributes {stable_mosaic.version = 11 : i64} {
  func.func @_attention_kernel(%arg0: i32, %arg1: i32, %arg2: memref<1x1x8x32xbf16, #tpu.memory_space<vmem>>, %arg3: memref<1x1x8x32xbf16, #tpu.memory_space<vmem>>, %arg4: memref<1x1x8x32xbf16, #tpu.memory_space<vmem>>, %arg5: memref<1x1x8xf32, #tpu.memory_space<vmem>>, %arg6: memref<1x8x32xbf16, #tpu.memory_space<vmem>>) attributes {dimension_semantics = [#tpu.dimension_semantics<parallel>, #tpu.dimension_semantics<parallel>], iteration_bounds = array<i64: 2, 1>, scalar_prefetch = 0 : i64, scratch_operands = 0 : i64, tpu.core_type = #tpu.core_type<tc>, window_params = [{transform_indices = @transform_0, window_bounds = array<i64: 1, 1, 8, 32>}, {transform_indices = @transform_1, window_bounds = array<i64: 1, 1, 8, 32>}, {transform_indices = @transform_2, window_bounds = array<i64: 1, 1, 8, 32>}, {transform_indices = @transform_3, window_bounds = array<i64: 1, 1, 8>}, {transform_indices = @transform_4, window_bounds = array<i64: 1, 8, 32>}]} {
    %c0 = arith.constant 0 : index
    %c0_0 = arith.constant 0 : index
    %c0_1 = arith.constant 0 : index
    %c0_2 = arith.constant 0 : index
    %0 = vector.load %arg2[%c0, %c0_0, %c0_1, %c0_2] : memref<1x1x8x32xbf16, #tpu.memory_space<vmem>>, vector<1x1x8x32xbf16>
    %1 = vector.shape_cast %0 : vector<1x1x8x32xbf16> to vector<8x32xbf16>
    %c0_3 = arith.constant 0 : index
    %c0_4 = arith.constant 0 : index
    %c0_5 = arith.constant 0 : index
    %c0_6 = arith.constant 0 : index
    %2 = vector.load %arg3[%c0_3, %c0_4, %c0_5, %c0_6] : memref<1x1x8x32xbf16, #tpu.memory_space<vmem>>, vector<1x1x8x32xbf16>
    %3 = vector.shape_cast %2 : vector<1x1x8x32xbf16> to vector<8x32xbf16>
    %c0_7 = arith.constant 0 : index
    %c0_8 = arith.constant 0 : index
    %c0_9 = arith.constant 0 : index
    %c0_10 = arith.constant 0 : index
    %4 = vector.load %arg4[%c0_7, %c0_8, %c0_9, %c0_10] : memref<1x1x8x32xbf16, #tpu.memory_space<vmem>>, vector<1x1x8x32xbf16>
    %5 = vector.shape_cast %4 : vector<1x1x8x32xbf16> to vector<8x32xbf16>
    %c0_11 = arith.constant 0 : index
    %c0_12 = arith.constant 0 : index
    %c0_13 = arith.constant 0 : index
    %6 = vector.load %arg5[%c0_11, %c0_12, %c0_13] : memref<1x1x8xf32, #tpu.memory_space<vmem>>, vector<1x1x8xf32>
    %7 = vector.shape_cast %6 : vector<1x1x8xf32> to vector<1x8xf32>
    %8 = vector.extract_strided_slice %1 {offsets = [0, 0], sizes = [8, 8], strides = [1, 1]} : vector<8x32xbf16> to vector<8x8xbf16>
    %9 = vector.extract_strided_slice %3 {offsets = [0, 0], sizes = [8, 8], strides = [1, 1]} : vector<8x32xbf16> to vector<8x8xbf16>
    %cst = arith.constant dense<0.000000e+00> : vector<8x8xf32>
    %10 = tpu.matmul %8, %9, %cst {dimension_numbers = #tpu.dot_dimension_numbers<[1], [1], [0], [0], [0, 0, 1, 0], [], []>} : vector<8x8xbf16>, vector<8x8xbf16>, vector<8x8xf32> -> vector<8x8xf32>
    %11 = vector.broadcast %7 : vector<1x8xf32> to vector<8x8xf32>
    %12 = arith.addf %10, %11 : vector<8x8xf32>
    %cst_14 = arith.constant dense<0xFF800000> : vector<8xf32>
    %13 = vector.multi_reduction <maximumf>, %12, %cst_14 [1] : vector<8x8xf32> to vector<8xf32>
    %14 = vector.shape_cast %13 : vector<8xf32> to vector<8x1xf32>
    %15 = vector.broadcast %14 : vector<8x1xf32> to vector<8x8xf32>
    %16 = arith.subf %12, %15 : vector<8x8xf32>
    %17 = math.exp %16 : vector<8x8xf32>
    %cst_15 = arith.constant dense<0.000000e+00> : vector<8xf32>
    %18 = vector.multi_reduction <add>, %17, %cst_15 [1] : vector<8x8xf32> to vector<8xf32>
    %19 = vector.shape_cast %18 : vector<8xf32> to vector<8x1xf32>
    %20 = arith.truncf %17 : vector<8x8xf32> to vector<8x8xbf16>
    %21 = vector.extract_strided_slice %5 {offsets = [0, 0], sizes = [8, 8], strides = [1, 1]} : vector<8x32xbf16> to vector<8x8xbf16>
    %cst_16 = arith.constant dense<0.000000e+00> : vector<8x8xf32>
    %22 = tpu.matmul %20, %21, %cst_16 {dimension_numbers = #tpu.dot_dimension_numbers<[1], [0], [0], [1], [0, 0, 1, 1], [], []>} : vector<8x8xbf16>, vector<8x8xbf16>, vector<8x8xf32> -> vector<8x8xf32>
    %23 = tpu.reciprocal %19 {approx = true} : vector<8x1xf32> -> vector<8x1xf32>
    %24 = vector.broadcast %23 : vector<8x1xf32> to vector<8x8xf32>
    %25 = arith.mulf %22, %24 : vector<8x8xf32>
    %26 = arith.truncf %25 : vector<8x8xf32> to vector<8x8xbf16>
    %27 = vector.extract_strided_slice %1 {offsets = [0, 8], sizes = [8, 8], strides = [1, 1]} : vector<8x32xbf16> to vector<8x8xbf16>
    %28 = vector.extract_strided_slice %3 {offsets = [0, 8], sizes = [8, 8], strides = [1, 1]} : vector<8x32xbf16> to vector<8x8xbf16>
    %cst_17 = arith.constant dense<0.000000e+00> : vector<8x8xf32>
    %29 = tpu.matmul %27, %28, %cst_17 {dimension_numbers = #tpu.dot_dimension_numbers<[1], [1], [0], [0], [0, 0, 1, 0], [], []>} : vector<8x8xbf16>, vector<8x8xbf16>, vector<8x8xf32> -> vector<8x8xf32>
    %30 = vector.broadcast %7 : vector<1x8xf32> to vector<8x8xf32>
    %31 = arith.addf %29, %30 : vector<8x8xf32>
    %cst_18 = arith.constant dense<0xFF800000> : vector<8xf32>
    %32 = vector.multi_reduction <maximumf>, %31, %cst_18 [1] : vector<8x8xf32> to vector<8xf32>
    %33 = vector.shape_cast %32 : vector<8xf32> to vector<8x1xf32>
    %34 = vector.broadcast %33 : vector<8x1xf32> to vector<8x8xf32>
    %35 = arith.subf %31, %34 : vector<8x8xf32>
    %36 = math.exp %35 : vector<8x8xf32>
    %cst_19 = arith.constant dense<0.000000e+00> : vector<8xf32>
    %37 = vector.multi_reduction <add>, %36, %cst_19 [1] : vector<8x8xf32> to vector<8xf32>
    %38 = vector.shape_cast %37 : vector<8xf32> to vector<8x1xf32>
    %39 = arith.truncf %36 : vector<8x8xf32> to vector<8x8xbf16>
    %40 = vector.extract_strided_slice %5 {offsets = [0, 8], sizes = [8, 8], strides = [1, 1]} : vector<8x32xbf16> to vector<8x8xbf16>
    %cst_20 = arith.constant dense<0.000000e+00> : vector<8x8xf32>
    %41 = tpu.matmul %39, %40, %cst_20 {dimension_numbers = #tpu.dot_dimension_numbers<[1], [0], [0], [1], [0, 0, 1, 1], [], []>} : vector<8x8xbf16>, vector<8x8xbf16>, vector<8x8xf32> -> vector<8x8xf32>
    %42 = tpu.reciprocal %38 {approx = true} : vector<8x1xf32> -> vector<8x1xf32>
    %43 = vector.broadcast %42 : vector<8x1xf32> to vector<8x8xf32>
    %44 = arith.mulf %41, %43 : vector<8x8xf32>
    %45 = arith.truncf %44 : vector<8x8xf32> to vector<8x8xbf16>
    %46 = vector.extract_strided_slice %1 {offsets = [0, 16], sizes = [8, 8], strides = [1, 1]} : vector<8x32xbf16> to vector<8x8xbf16>
    %47 = vector.extract_strided_slice %3 {offsets = [0, 16], sizes = [8, 8], strides = [1, 1]} : vector<8x32xbf16> to vector<8x8xbf16>
    %cst_21 = arith.constant dense<0.000000e+00> : vector<8x8xf32>
    %48 = tpu.matmul %46, %47, %cst_21 {dimension_numbers = #tpu.dot_dimension_numbers<[1], [1], [0], [0], [0, 0, 1, 0], [], []>} : vector<8x8xbf16>, vector<8x8xbf16>, vector<8x8xf32> -> vector<8x8xf32>
    %49 = vector.broadcast %7 : vector<1x8xf32> to vector<8x8xf32>
    %50 = arith.addf %48, %49 : vector<8x8xf32>
    %cst_22 = arith.constant dense<0xFF800000> : vector<8xf32>
    %51 = vector.multi_reduction <maximumf>, %50, %cst_22 [1] : vector<8x8xf32> to vector<8xf32>
    %52 = vector.shape_cast %51 : vector<8xf32> to vector<8x1xf32>
    %53 = vector.broadcast %52 : vector<8x1xf32> to vector<8x8xf32>
    %54 = arith.subf %50, %53 : vector<8x8xf32>
    %55 = math.exp %54 : vector<8x8xf32>
    %cst_23 = arith.constant dense<0.000000e+00> : vector<8xf32>
    %56 = vector.multi_reduction <add>, %55, %cst_23 [1] : vector<8x8xf32> to vector<8xf32>
    %57 = vector.shape_cast %56 : vector<8xf32> to vector<8x1xf32>
    %58 = arith.truncf %55 : vector<8x8xf32> to vector<8x8xbf16>
    %59 = vector.extract_strided_slice %5 {offsets = [0, 16], sizes = [8, 8], strides = [1, 1]} : vector<8x32xbf16> to vector<8x8xbf16>
    %cst_24 = arith.constant dense<0.000000e+00> : vector<8x8xf32>
    %60 = tpu.matmul %58, %59, %cst_24 {dimension_numbers = #tpu.dot_dimension_numbers<[1], [0], [0], [1], [0, 0, 1, 1], [], []>} : vector<8x8xbf16>, vector<8x8xbf16>, vector<8x8xf32> -> vector<8x8xf32>
    %61 = tpu.reciprocal %57 {approx = true} : vector<8x1xf32> -> vector<8x1xf32>
    %62 = vector.broadcast %61 : vector<8x1xf32> to vector<8x8xf32>
    %63 = arith.mulf %60, %62 : vector<8x8xf32>
    %64 = arith.truncf %63 : vector<8x8xf32> to vector<8x8xbf16>
    %65 = vector.extract_strided_slice %1 {offsets = [0, 24], sizes = [8, 8], strides = [1, 1]} : vector<8x32xbf16> to vector<8x8xbf16>
    %66 = vector.extract_strided_slice %3 {offsets = [0, 24], sizes = [8, 8], strides = [1, 1]} : vector<8x32xbf16> to vector<8x8xbf16>
    %cst_25 = arith.constant dense<0.000000e+00> : vector<8x8xf32>
    %67 = tpu.matmul %65, %66, %cst_25 {dimension_numbers = #tpu.dot_dimension_numbers<[1], [1], [0], [0], [0, 0, 1, 0], [], []>} : vector<8x8xbf16>, vector<8x8xbf16>, vector<8x8xf32> -> vector<8x8xf32>
    %68 = vector.broadcast %7 : vector<1x8xf32> to vector<8x8xf32>
    %69 = arith.addf %67, %68 : vector<8x8xf32>
    %cst_26 = arith.constant dense<0xFF800000> : vector<8xf32>
    %70 = vector.multi_reduction <maximumf>, %69, %cst_26 [1] : vector<8x8xf32> to vector<8xf32>
    %71 = vector.shape_cast %70 : vector<8xf32> to vector<8x1xf32>
    %72 = vector.broadcast %71 : vector<8x1xf32> to vector<8x8xf32>
    %73 = arith.subf %69, %72 : vector<8x8xf32>
    %74 = math.exp %73 : vector<8x8xf32>
    %cst_27 = arith.constant dense<0.000000e+00> : vector<8xf32>
    %75 = vector.multi_reduction <add>, %74, %cst_27 [1] : vector<8x8xf32> to vector<8xf32>
    %76 = vector.shape_cast %75 : vector<8xf32> to vector<8x1xf32>
    %77 = arith.truncf %74 : vector<8x8xf32> to vector<8x8xbf16>
    %78 = vector.extract_strided_slice %5 {offsets = [0, 24], sizes = [8, 8], strides = [1, 1]} : vector<8x32xbf16> to vector<8x8xbf16>
    %cst_28 = arith.constant dense<0.000000e+00> : vector<8x8xf32>
    %79 = tpu.matmul %77, %78, %cst_28 {dimension_numbers = #tpu.dot_dimension_numbers<[1], [0], [0], [1], [0, 0, 1, 1], [], []>} : vector<8x8xbf16>, vector<8x8xbf16>, vector<8x8xf32> -> vector<8x8xf32>
    %80 = tpu.reciprocal %76 {approx = true} : vector<8x1xf32> -> vector<8x1xf32>
    %81 = vector.broadcast %80 : vector<8x1xf32> to vector<8x8xf32>
    %82 = arith.mulf %79, %81 : vector<8x8xf32>
    %83 = arith.truncf %82 : vector<8x8xf32> to vector<8x8xbf16>
    %84 = tpu.concatenate %26, %45, %64, %83 in 1 : vector<8x8xbf16>, vector<8x8xbf16>, vector<8x8xbf16>, vector<8x8xbf16> -> vector<8x32xbf16>
    %c0_29 = arith.constant 0 : index
    %c0_30 = arith.constant 0 : index
    %c0_31 = arith.constant 0 : index
    %85 = vector.load %arg6[%c0_29, %c0_30, %c0_31] : memref<1x8x32xbf16, #tpu.memory_space<vmem>>, vector<1x8x32xbf16>
    %86 = vector.shape_cast %85 : vector<1x8x32xbf16> to vector<8x32xbf16>
    %87 = vector.shape_cast %84 : vector<8x32xbf16> to vector<1x8x32xbf16>
    tpu.vector_store %arg6[%c0_29, %c0_30, %c0_31], %87 {strides = array<i32>} : memref<1x8x32xbf16, #tpu.memory_space<vmem>>, vector<1x8x32xbf16>,
    return
  }
  func.func @transform_0(%arg0: i32, %arg1: i32) -> (i32, i32, i32, i32) {
    %c0_i32 = arith.constant 0 : i32
    %c0_i32_0 = arith.constant 0 : i32
    %c0_i32_1 = arith.constant 0 : i32
    return %c0_i32, %arg0, %arg1, %c0_i32_0 : i32, i32, i32, i32
  }
  func.func @transform_1(%arg0: i32, %arg1: i32) -> (i32, i32, i32, i32) {
    %c1_i32 = arith.constant 1 : i32
    %c0_i32 = arith.constant 0 : i32
    %c0_i32_0 = arith.constant 0 : i32
    %c0_i32_1 = arith.constant 0 : i32
    return %c1_i32, %arg0, %c0_i32, %c0_i32_0 : i32, i32, i32, i32
  }
  func.func @transform_2(%arg0: i32, %arg1: i32) -> (i32, i32, i32, i32) {
    %c2_i32 = arith.constant 2 : i32
    %c0_i32 = arith.constant 0 : i32
    %c0_i32_0 = arith.constant 0 : i32
    %c0_i32_1 = arith.constant 0 : i32
    return %c2_i32, %arg0, %c0_i32, %c0_i32_0 : i32, i32, i32, i32
  }
  func.func @transform_3(%arg0: i32, %arg1: i32) -> (i32, i32, i32) {
    %c0_i32 = arith.constant 0 : i32
    %c0_i32_0 = arith.constant 0 : i32
    %c0_i32_1 = arith.constant 0 : i32
    return %arg0, %c0_i32, %c0_i32_0 : i32, i32, i32
  }
  func.func @transform_4(%arg0: i32, %arg1: i32) -> (i32, i32, i32) {
    %c0_i32 = arith.constant 0 : i32
    %c0_i32_0 = arith.constant 0 : i32
    return %arg0, %arg1, %c0_i32 : i32, i32, i32
  }
}

module attributes {stable_mosaic.version = 11 : i64} {
  func.func @_proj_res_ln_kernel(%arg0: i32, %arg1: memref<16x32xbf16, #tpu.memory_space<vmem>>, %arg2: memref<32x32xbf16, #tpu.memory_space<vmem>>, %arg3: memref<1x32xf32, #tpu.memory_space<vmem>>, %arg4: memref<16x32xbf16, #tpu.memory_space<vmem>>, %arg5: memref<1x32xf32, #tpu.memory_space<vmem>>, %arg6: memref<1x32xf32, #tpu.memory_space<vmem>>, %arg7: memref<16x32xbf16, #tpu.memory_space<vmem>>) attributes {dimension_semantics = [#tpu.dimension_semantics<parallel>], iteration_bounds = array<i64: 1>, scalar_prefetch = 0 : i64, scratch_operands = 0 : i64, tpu.core_type = #tpu.core_type<tc>, window_params = [{transform_indices = @transform_0, window_bounds = array<i64: 16, 32>}, {pipeline_mode = #tpu.pipeline_mode<synchronous>, transform_indices = @transform_1, window_bounds = array<i64: 32, 32>}, {pipeline_mode = #tpu.pipeline_mode<synchronous>, transform_indices = @transform_2, window_bounds = array<i64: 1, 32>}, {transform_indices = @transform_3, window_bounds = array<i64: 16, 32>}, {pipeline_mode = #tpu.pipeline_mode<synchronous>, transform_indices = @transform_4, window_bounds = array<i64: 1, 32>}, {pipeline_mode = #tpu.pipeline_mode<synchronous>, transform_indices = @transform_5, window_bounds = array<i64: 1, 32>}, {transform_indices = @transform_6, window_bounds = array<i64: 16, 32>}]} {
    %c0 = arith.constant 0 : index
    %c0_0 = arith.constant 0 : index
    %0 = vector.load %arg1[%c0, %c0_0] : memref<16x32xbf16, #tpu.memory_space<vmem>>, vector<16x32xbf16>
    %c0_1 = arith.constant 0 : index
    %c0_2 = arith.constant 0 : index
    %1 = vector.load %arg2[%c0_1, %c0_2] : memref<32x32xbf16, #tpu.memory_space<vmem>>, vector<32x32xbf16>
    %cst = arith.constant dense<0.000000e+00> : vector<16x32xf32>
    %2 = tpu.matmul %0, %1, %cst {dimension_numbers = #tpu.dot_dimension_numbers<[1], [0], [0], [1], [0, 0, 1, 1], [], []>} : vector<16x32xbf16>, vector<32x32xbf16>, vector<16x32xf32> -> vector<16x32xf32>
    %c0_3 = arith.constant 0 : index
    %c0_4 = arith.constant 0 : index
    %3 = vector.load %arg3[%c0_3, %c0_4] : memref<1x32xf32, #tpu.memory_space<vmem>>, vector<1x32xf32>
    %4 = vector.broadcast %3 : vector<1x32xf32> to vector<16x32xf32>
    %5 = arith.addf %2, %4 : vector<16x32xf32>
    %c0_5 = arith.constant 0 : index
    %c0_6 = arith.constant 0 : index
    %6 = vector.load %arg4[%c0_5, %c0_6] : memref<16x32xbf16, #tpu.memory_space<vmem>>, vector<16x32xbf16>
    %7 = arith.extf %6 : vector<16x32xbf16> to vector<16x32xf32>
    %8 = arith.addf %5, %7 : vector<16x32xf32>
    %cst_7 = arith.constant dense<0.000000e+00> : vector<16xf32>
    %9 = vector.multi_reduction <add>, %8, %cst_7 [1] : vector<16x32xf32> to vector<16xf32>
    %10 = vector.shape_cast %9 : vector<16xf32> to vector<16x1xf32>
    %cst_8 = arith.constant 3.200000e+01 : f32
    %11 = vector.broadcast %cst_8 : f32 to vector<16x1xf32>
    %12 = arith.divf %10, %11 : vector<16x1xf32>
    %13 = vector.broadcast %12 : vector<16x1xf32> to vector<16x32xf32>
    %14 = arith.subf %8, %13 : vector<16x32xf32>
    %15 = arith.mulf %14, %14 : vector<16x32xf32>
    %cst_9 = arith.constant dense<0.000000e+00> : vector<16xf32>
    %16 = vector.multi_reduction <add>, %15, %cst_9 [1] : vector<16x32xf32> to vector<16xf32>
    %17 = vector.shape_cast %16 : vector<16xf32> to vector<16x1xf32>
    %cst_10 = arith.constant 3.200000e+01 : f32
    %18 = vector.broadcast %cst_10 : f32 to vector<16x1xf32>
    %19 = arith.divf %17, %18 : vector<16x1xf32>
    %20 = vector.broadcast %12 : vector<16x1xf32> to vector<16x32xf32>
    %21 = arith.subf %8, %20 : vector<16x32xf32>
    %cst_11 = arith.constant 9.99999996E-13 : f32
    %22 = vector.broadcast %cst_11 : f32 to vector<16x1xf32>
    %23 = arith.addf %19, %22 : vector<16x1xf32>
    %24 = math.rsqrt %23 : vector<16x1xf32>
    %25 = vector.broadcast %24 : vector<16x1xf32> to vector<16x32xf32>
    %26 = arith.mulf %21, %25 : vector<16x32xf32>
    %c0_12 = arith.constant 0 : index
    %c0_13 = arith.constant 0 : index
    %27 = vector.load %arg5[%c0_12, %c0_13] : memref<1x32xf32, #tpu.memory_space<vmem>>, vector<1x32xf32>
    %28 = vector.broadcast %27 : vector<1x32xf32> to vector<16x32xf32>
    %29 = arith.mulf %26, %28 : vector<16x32xf32>
    %c0_14 = arith.constant 0 : index
    %c0_15 = arith.constant 0 : index
    %30 = vector.load %arg6[%c0_14, %c0_15] : memref<1x32xf32, #tpu.memory_space<vmem>>, vector<1x32xf32>
    %31 = vector.broadcast %30 : vector<1x32xf32> to vector<16x32xf32>
    %32 = arith.addf %29, %31 : vector<16x32xf32>
    %33 = arith.truncf %32 : vector<16x32xf32> to vector<16x32xbf16>
    %c0_16 = arith.constant 0 : index
    %c0_17 = arith.constant 0 : index
    %34 = vector.load %arg7[%c0_16, %c0_17] : memref<16x32xbf16, #tpu.memory_space<vmem>>, vector<16x32xbf16>
    tpu.vector_store %arg7[%c0_16, %c0_17], %33 {strides = array<i32>} : memref<16x32xbf16, #tpu.memory_space<vmem>>, vector<16x32xbf16>,
    return
  }
  func.func @transform_0(%arg0: i32) -> (i32, i32) {
    %c0_i32 = arith.constant 0 : i32
    %c0_i32_0 = arith.constant 0 : i32
    return %arg0, %c0_i32 : i32, i32
  }
  func.func @transform_1(%arg0: i32) -> (i32, i32) {
    %c0_i32 = arith.constant 0 : i32
    %c0_i32_0 = arith.constant 0 : i32
    %c0_i32_1 = arith.constant 0 : i32
    return %c0_i32, %c0_i32_0 : i32, i32
  }
  func.func @transform_2(%arg0: i32) -> (i32, i32) {
    %c0_i32 = arith.constant 0 : i32
    %c0_i32_0 = arith.constant 0 : i32
    %c0_i32_1 = arith.constant 0 : i32
    return %c0_i32, %c0_i32_0 : i32, i32
  }
  func.func @transform_3(%arg0: i32) -> (i32, i32) {
    %c0_i32 = arith.constant 0 : i32
    %c0_i32_0 = arith.constant 0 : i32
    return %arg0, %c0_i32 : i32, i32
  }
  func.func @transform_4(%arg0: i32) -> (i32, i32) {
    %c0_i32 = arith.constant 0 : i32
    %c0_i32_0 = arith.constant 0 : i32
    %c0_i32_1 = arith.constant 0 : i32
    return %c0_i32, %c0_i32_0 : i32, i32
  }
  func.func @transform_5(%arg0: i32) -> (i32, i32) {
    %c0_i32 = arith.constant 0 : i32
    %c0_i32_0 = arith.constant 0 : i32
    %c0_i32_1 = arith.constant 0 : i32
    return %c0_i32, %c0_i32_0 : i32, i32
  }
  func.func @transform_6(%arg0: i32) -> (i32, i32) {
    %c0_i32 = arith.constant 0 : i32
    %c0_i32_0 = arith.constant 0 : i32
    return %arg0, %c0_i32 : i32, i32
  }
}

module attributes {stable_mosaic.version = 11 : i64} {
  func.func @_ffn_kernel(%arg0: i32, %arg1: memref<16x32xbf16, #tpu.memory_space<vmem>>, %arg2: memref<32x128xbf16, #tpu.memory_space<vmem>>, %arg3: memref<1x128xf32, #tpu.memory_space<vmem>>, %arg4: memref<128x32xbf16, #tpu.memory_space<vmem>>, %arg5: memref<1x32xf32, #tpu.memory_space<vmem>>, %arg6: memref<1x32xf32, #tpu.memory_space<vmem>>, %arg7: memref<1x32xf32, #tpu.memory_space<vmem>>, %arg8: memref<16x32xbf16, #tpu.memory_space<vmem>>) attributes {dimension_semantics = [#tpu.dimension_semantics<parallel>], iteration_bounds = array<i64: 1>, scalar_prefetch = 0 : i64, scratch_operands = 0 : i64, tpu.core_type = #tpu.core_type<tc>, window_params = [{transform_indices = @transform_0, window_bounds = array<i64: 16, 32>}, {pipeline_mode = #tpu.pipeline_mode<synchronous>, transform_indices = @transform_1, window_bounds = array<i64: 32, 128>}, {pipeline_mode = #tpu.pipeline_mode<synchronous>, transform_indices = @transform_2, window_bounds = array<i64: 1, 128>}, {pipeline_mode = #tpu.pipeline_mode<synchronous>, transform_indices = @transform_3, window_bounds = array<i64: 128, 32>}, {pipeline_mode = #tpu.pipeline_mode<synchronous>, transform_indices = @transform_4, window_bounds = array<i64: 1, 32>}, {pipeline_mode = #tpu.pipeline_mode<synchronous>, transform_indices = @transform_5, window_bounds = array<i64: 1, 32>}, {pipeline_mode = #tpu.pipeline_mode<synchronous>, transform_indices = @transform_6, window_bounds = array<i64: 1, 32>}, {transform_indices = @transform_7, window_bounds = array<i64: 16, 32>}]} {
    %c0 = arith.constant 0 : index
    %c0_0 = arith.constant 0 : index
    %0 = vector.load %arg1[%c0, %c0_0] : memref<16x32xbf16, #tpu.memory_space<vmem>>, vector<16x32xbf16>
    %c0_1 = arith.constant 0 : index
    %c0_2 = arith.constant 0 : index
    %1 = vector.load %arg2[%c0_1, %c0_2] : memref<32x128xbf16, #tpu.memory_space<vmem>>, vector<32x128xbf16>
    %cst = arith.constant dense<0.000000e+00> : vector<16x128xf32>
    %2 = tpu.matmul %0, %1, %cst {dimension_numbers = #tpu.dot_dimension_numbers<[1], [0], [0], [1], [0, 0, 1, 1], [], []>} : vector<16x32xbf16>, vector<32x128xbf16>, vector<16x128xf32> -> vector<16x128xf32>
    %c0_3 = arith.constant 0 : index
    %c0_4 = arith.constant 0 : index
    %3 = vector.load %arg3[%c0_3, %c0_4] : memref<1x128xf32, #tpu.memory_space<vmem>>, vector<1x128xf32>
    %4 = vector.broadcast %3 : vector<1x128xf32> to vector<16x128xf32>
    %5 = arith.addf %2, %4 : vector<16x128xf32>
    %cst_5 = arith.constant 5.000000e-01 : f32
    %6 = vector.broadcast %cst_5 : f32 to vector<16x128xf32>
    %7 = arith.mulf %6, %5 : vector<16x128xf32>
    %cst_6 = arith.constant 0.707106769 : f32
    %8 = vector.broadcast %cst_6 : f32 to vector<16x128xf32>
    %9 = arith.mulf %5, %8 : vector<16x128xf32>
    %10 = math.erf %9 : vector<16x128xf32>
    %cst_7 = arith.constant 1.000000e+00 : f32
    %11 = vector.broadcast %cst_7 : f32 to vector<16x128xf32>
    %12 = arith.addf %11, %10 : vector<16x128xf32>
    %13 = arith.mulf %7, %12 : vector<16x128xf32>
    %14 = arith.truncf %13 : vector<16x128xf32> to vector<16x128xbf16>
    %c0_8 = arith.constant 0 : index
    %c0_9 = arith.constant 0 : index
    %15 = vector.load %arg4[%c0_8, %c0_9] : memref<128x32xbf16, #tpu.memory_space<vmem>>, vector<128x32xbf16>
    %cst_10 = arith.constant dense<0.000000e+00> : vector<16x32xf32>
    %16 = tpu.matmul %14, %15, %cst_10 {dimension_numbers = #tpu.dot_dimension_numbers<[1], [0], [0], [1], [0, 0, 1, 1], [], []>} : vector<16x128xbf16>, vector<128x32xbf16>, vector<16x32xf32> -> vector<16x32xf32>
    %c0_11 = arith.constant 0 : index
    %c0_12 = arith.constant 0 : index
    %17 = vector.load %arg5[%c0_11, %c0_12] : memref<1x32xf32, #tpu.memory_space<vmem>>, vector<1x32xf32>
    %18 = vector.broadcast %17 : vector<1x32xf32> to vector<16x32xf32>
    %19 = arith.addf %16, %18 : vector<16x32xf32>
    %c0_13 = arith.constant 0 : index
    %c0_14 = arith.constant 0 : index
    %20 = vector.load %arg1[%c0_13, %c0_14] : memref<16x32xbf16, #tpu.memory_space<vmem>>, vector<16x32xbf16>
    %21 = arith.extf %20 : vector<16x32xbf16> to vector<16x32xf32>
    %22 = arith.addf %19, %21 : vector<16x32xf32>
    %cst_15 = arith.constant dense<0.000000e+00> : vector<16xf32>
    %23 = vector.multi_reduction <add>, %22, %cst_15 [1] : vector<16x32xf32> to vector<16xf32>
    %24 = vector.shape_cast %23 : vector<16xf32> to vector<16x1xf32>
    %cst_16 = arith.constant 3.200000e+01 : f32
    %25 = vector.broadcast %cst_16 : f32 to vector<16x1xf32>
    %26 = arith.divf %24, %25 : vector<16x1xf32>
    %27 = vector.broadcast %26 : vector<16x1xf32> to vector<16x32xf32>
    %28 = arith.subf %22, %27 : vector<16x32xf32>
    %29 = arith.mulf %28, %28 : vector<16x32xf32>
    %cst_17 = arith.constant dense<0.000000e+00> : vector<16xf32>
    %30 = vector.multi_reduction <add>, %29, %cst_17 [1] : vector<16x32xf32> to vector<16xf32>
    %31 = vector.shape_cast %30 : vector<16xf32> to vector<16x1xf32>
    %cst_18 = arith.constant 3.200000e+01 : f32
    %32 = vector.broadcast %cst_18 : f32 to vector<16x1xf32>
    %33 = arith.divf %31, %32 : vector<16x1xf32>
    %34 = vector.broadcast %26 : vector<16x1xf32> to vector<16x32xf32>
    %35 = arith.subf %22, %34 : vector<16x32xf32>
    %cst_19 = arith.constant 9.99999996E-13 : f32
    %36 = vector.broadcast %cst_19 : f32 to vector<16x1xf32>
    %37 = arith.addf %33, %36 : vector<16x1xf32>
    %38 = math.rsqrt %37 : vector<16x1xf32>
    %39 = vector.broadcast %38 : vector<16x1xf32> to vector<16x32xf32>
    %40 = arith.mulf %35, %39 : vector<16x32xf32>
    %c0_20 = arith.constant 0 : index
    %c0_21 = arith.constant 0 : index
    %41 = vector.load %arg6[%c0_20, %c0_21] : memref<1x32xf32, #tpu.memory_space<vmem>>, vector<1x32xf32>
    %42 = vector.broadcast %41 : vector<1x32xf32> to vector<16x32xf32>
    %43 = arith.mulf %40, %42 : vector<16x32xf32>
    %c0_22 = arith.constant 0 : index
    %c0_23 = arith.constant 0 : index
    %44 = vector.load %arg7[%c0_22, %c0_23] : memref<1x32xf32, #tpu.memory_space<vmem>>, vector<1x32xf32>
    %45 = vector.broadcast %44 : vector<1x32xf32> to vector<16x32xf32>
    %46 = arith.addf %43, %45 : vector<16x32xf32>
    %47 = arith.truncf %46 : vector<16x32xf32> to vector<16x32xbf16>
    %c0_24 = arith.constant 0 : index
    %c0_25 = arith.constant 0 : index
    %48 = vector.load %arg8[%c0_24, %c0_25] : memref<16x32xbf16, #tpu.memory_space<vmem>>, vector<16x32xbf16>
    tpu.vector_store %arg8[%c0_24, %c0_25], %47 {strides = array<i32>} : memref<16x32xbf16, #tpu.memory_space<vmem>>, vector<16x32xbf16>,
    return
  }
  func.func @transform_0(%arg0: i32) -> (i32, i32) {
    %c0_i32 = arith.constant 0 : i32
    %c0_i32_0 = arith.constant 0 : i32
    return %arg0, %c0_i32 : i32, i32
  }
  func.func @transform_1(%arg0: i32) -> (i32, i32) {
    %c0_i32 = arith.constant 0 : i32
    %c0_i32_0 = arith.constant 0 : i32
    %c0_i32_1 = arith.constant 0 : i32
    return %c0_i32, %c0_i32_0 : i32, i32
  }
  func.func @transform_2(%arg0: i32) -> (i32, i32) {
    %c0_i32 = arith.constant 0 : i32
    %c0_i32_0 = arith.constant 0 : i32
    %c0_i32_1 = arith.constant 0 : i32
    return %c0_i32, %c0_i32_0 : i32, i32
  }
  func.func @transform_3(%arg0: i32) -> (i32, i32) {
    %c0_i32 = arith.constant 0 : i32
    %c0_i32_0 = arith.constant 0 : i32
    %c0_i32_1 = arith.constant 0 : i32
    return %c0_i32, %c0_i32_0 : i32, i32
  }
  func.func @transform_4(%arg0: i32) -> (i32, i32) {
    %c0_i32 = arith.constant 0 : i32
    %c0_i32_0 = arith.constant 0 : i32
    %c0_i32_1 = arith.constant 0 : i32
    return %c0_i32, %c0_i32_0 : i32, i32
  }
  func.func @transform_5(%arg0: i32) -> (i32, i32) {
    %c0_i32 = arith.constant 0 : i32
    %c0_i32_0 = arith.constant 0 : i32
    %c0_i32_1 = arith.constant 0 : i32
    return %c0_i32, %c0_i32_0 : i32, i32
  }
  func.func @transform_6(%arg0: i32) -> (i32, i32) {
    %c0_i32 = arith.constant 0 : i32
    %c0_i32_0 = arith.constant 0 : i32
    %c0_i32_1 = arith.constant 0 : i32
    return %c0_i32, %c0_i32_0 : i32, i32
  }
  func.func @transform_7(%arg0: i32) -> (i32, i32) {
    %c0_i32 = arith.constant 0 : i32
    %c0_i32_0 = arith.constant 0 : i32
    return %arg0, %c0_i32 : i32, i32
  }
}

</mosaic_0001>

<llo_original>
// kernel: behrt_forward.9
$region0: #{behrt_forward.9}
  #allocation0 [shape = 'u32[]', space=smem, size = 0x4, offset = 0x4, fixed_abs, tag = 'smem constant byte address 0x4 - core index']
  #allocation1 [shape = 'u32[144,128]{1,0:T(1,128)}', space=vmem, size = 0x12000, scoped, tag = 'internal scratch']
  %s0 = inlined_call_operand.vmem [shape: f32[16,32], index: 0, kind: input, shape index: {}]
  %s1 = inlined_call_operand.vmem [shape: f32[1,32], index: 1, kind: input, shape index: {}]
  %s2 = inlined_call_operand.vmem [shape: f32[1,32], index: 2, kind: input, shape index: {}]
  %s3 = inlined_call_operand.vmem [shape: bf16[16,32], index: 3, kind: output, shape index: {}]
  %s4 = sld [smem:[#allocation0]]
  $region22: #{behrt_forward.9} parent=0
    _
  %s6 = ssub.s32 1, %s4
  %s7 = scalar_select 0, %s6, %s4
  // Predicated region
  $region2: #{behrt_forward.9} parent=0 // pred_check
    _
  $region3: #{behrt_forward.9} parent=0 // pred_check_branch
    %9 = sbr.rel (0) target = $region5
  $region4: #{behrt_forward.9} parent=0 // pred_region
    _
  $region5: #{behrt_forward.9} parent=0 // pred_fallthru
    _
  // Predicated region
  $region6: #{behrt_forward.9} parent=0 // pred_check
    _
  $region7: #{behrt_forward.9} parent=0 // pred_check_branch
    %11 = sbr.rel (0) target = $region9
  $region8: #{behrt_forward.9} parent=0 // pred_region
    _
  $region9: #{behrt_forward.9} parent=0 // pred_fallthru
    _
  // Predicated region
  $region10: #{behrt_forward.9} parent=0 // pred_check
    _
  $region11: #{behrt_forward.9} parent=0 // pred_check_branch
    %13 = sbr.rel (0) target = $region13
  $region12: #{behrt_forward.9} parent=0 // pred_region
    _
  $region13: #{behrt_forward.9} parent=0 // pred_fallthru
    _
  %v14 = vld [vmem:[%s0] sm:$0xff]
  %v15 = vld [vmem:[%s0 + $0x8] sm:$0xff]
  %vm16 = vcmask 261120
  %v17 = vsel %vm16, %v14, 0.0
  %18 = vadd.xlane.f32.xlu0 %v17
  %v19 = vpop.xlane.xlu0 %18
  %v20 = vsel %vm16, %v15, 0.0
  %21 = vadd.xlane.f32.xlu0 %v20
  %v22 = vpop.xlane.xlu0 %21
  %v23 = vrcp.pop 32.0
  %v24 = vmul.f32 %v19, %v23
  %v25 = vmul.f32 %v22, %v23
  %v26 = vsub.f32 %v14, %v24
  %v27 = vsub.f32 %v15, %v25
  %v28 = vmul.f32 %v26, %v26
  %v29 = vmul.f32 %v27, %v27
  %v30 = vsel %vm16, %v28, 0.0
  %31 = vadd.xlane.f32.xlu0 %v30
  %v32 = vpop.xlane.xlu0 %31
  %v33 = vsel %vm16, %v29, 0.0
  %34 = vadd.xlane.f32.xlu0 %v33
  %v35 = vpop.xlane.xlu0 %34
  %v36 = vmul.f32 %v32, %v23
  %v37 = vmul.f32 %v35, %v23
  %v38 = vadd.f32 %v36, 1e-12
  %v39 = vadd.f32 %v37, 1e-12
  %v40 = vrsqrt.pop %v38
  %v41 = vrsqrt.pop %v39
  %v42 = vmul.f32 %v26, %v40
  %v43 = vmul.f32 %v27, %v41
  %v44 = vld [vmem:[%s1] sm:$0x1]
  %v46 = vlaneseq
  %v47 = vshrl.u32 %v46, 7
  %v48 = vsub.s32 0, %v47
  %v49 = vrot.slane %v44, %v48
  %v51 = vmul.f32 %v42, %v49
  %v52 = vmul.f32 %v43, %v49
  %v53 = vld [vmem:[%s2] sm:$0x1]
  %v55 = vlaneseq
  %v56 = vshrl.u32 %v55, 7
  %v57 = vsub.s32 0, %v56
  %v58 = vrot.slane %v53, %v57
  %v60 = vadd.f32 %v51, %v58
  %v61 = vadd.f32 %v52, %v58
  %v62 = vpack.c.bf16 %v61, %v60
  %v64 = vunpack.c.l.b16 %v62
  %v65 = vunpack.c.h.b16 %v62
  %v66 = vpack.c.b16 %v64, %v64
  %v67 = vpack.c.b16 %v65, %v65
  %vm70 = vcmask 257024
  %71 = vst.msk [vmem:[%s3] sm:$0xf] %vm70, %v66
  %72 = vst.msk [vmem:[%s3 + $0x4] sm:$0xf] %vm70, %v67
  // Predicated region
  $region14: #{behrt_forward.9} parent=0 // pred_check
    _
  $region15: #{behrt_forward.9} parent=0 // pred_check_branch
    %74 = sbr.rel (0) target = $region17
  $region16: #{behrt_forward.9} parent=0 // pred_region
    _
  $region17: #{behrt_forward.9} parent=0 // pred_fallthru
    _
  // Predicated region
  $region18: #{behrt_forward.9} parent=0 // pred_check
    _
  $region19: #{behrt_forward.9} parent=0 // pred_check_branch
    %76 = sbr.rel (0) target = $region21
  $region20: #{behrt_forward.9} parent=0 // pred_region
    _
  $region21: #{behrt_forward.9} parent=0 // pred_fallthru
    _

// kernel: behrt_forward.12
$region0: #{behrt_forward.12}
  #allocation0 [shape = 'u32[]', space=smem, size = 0x4, offset = 0x4, fixed_abs, tag = 'smem constant byte address 0x4 - core index']
  #allocation1 [shape = 'u32[144,128]{1,0:T(1,128)}', space=vmem, size = 0x12000, scoped, tag = 'internal scratch']
  %s0 = inlined_call_operand.vmem [shape: bf16[16,32], index: 0, kind: input, shape index: {}]
  %s1 = inlined_call_operand.vmem [shape: bf16[32,32], index: 1, kind: input, shape index: {}]
  %s2 = inlined_call_operand.vmem [shape: f32[1,32], index: 2, kind: input, shape index: {}]
  %s3 = inlined_call_operand.vmem [shape: bf16[16,32], index: 3, kind: input, shape index: {}]
  %s4 = inlined_call_operand.vmem [shape: f32[1,32], index: 4, kind: input, shape index: {}]
  %s5 = inlined_call_operand.vmem [shape: f32[1,32], index: 5, kind: input, shape index: {}]
  %s6 = inlined_call_operand.vmem [shape: bf16[16,32], index: 6, kind: output, shape index: {}]
  %s7 = sld [smem:[#allocation0]]
  $region34: #{behrt_forward.12} parent=0
    _
  %s9 = ssub.s32 1, %s7
  %s10 = scalar_select 0, %s9, %s7
  // Predicated region
  $region2: #{behrt_forward.12} parent=0 // pred_check
    _
  $region3: #{behrt_forward.12} parent=0 // pred_check_branch
    %12 = sbr.rel (0) target = $region5
  $region4: #{behrt_forward.12} parent=0 // pred_region
    _
  $region5: #{behrt_forward.12} parent=0 // pred_fallthru
    _
  // Predicated region
  $region6: #{behrt_forward.12} parent=0 // pred_check
    _
  $region7: #{behrt_forward.12} parent=0 // pred_check_branch
    %14 = sbr.rel (0) target = $region9
  $region8: #{behrt_forward.12} parent=0 // pred_region
    _
  $region9: #{behrt_forward.12} parent=0 // pred_fallthru
    _
  // Predicated region
  $region10: #{behrt_forward.12} parent=0 // pred_check
    _
  $region11: #{behrt_forward.12} parent=0 // pred_check_branch
    %16 = sbr.rel (0) target = $region13
  $region12: #{behrt_forward.12} parent=0 // pred_region
    _
  $region13: #{behrt_forward.12} parent=0 // pred_fallthru
    _
  // Predicated region
  $region14: #{behrt_forward.12} parent=0 // pred_check
    _
  $region15: #{behrt_forward.12} parent=0 // pred_check_branch
    %18 = sbr.rel (0) target = $region17
  $region16: #{behrt_forward.12} parent=0 // pred_region
    _
  $region17: #{behrt_forward.12} parent=0 // pred_fallthru
    _
  // Predicated region
  $region18: #{behrt_forward.12} parent=0 // pred_check
    _
  $region19: #{behrt_forward.12} parent=0 // pred_check_branch
    %20 = sbr.rel (0) target = $region21
  $region20: #{behrt_forward.12} parent=0 // pred_region
    _
  $region21: #{behrt_forward.12} parent=0 // pred_fallthru
    _
  // Predicated region
  $region22: #{behrt_forward.12} parent=0 // pred_check
    _
  $region23: #{behrt_forward.12} parent=0 // pred_check_branch
    %22 = sbr.rel (0) target = $region25
  $region24: #{behrt_forward.12} parent=0 // pred_region
    _
  $region25: #{behrt_forward.12} parent=0 // pred_fallthru
    _
  %v24 = vld [vmem:[%s0] sm:$0xf]
  %v25 = vld [vmem:[%s0 + $0x4] sm:$0xf]
  %v26 = vld [vmem:[%s1] sm:$0xf]
  %v27 = vld [vmem:[%s1 + $0x4] sm:$0xf]
  %v28 = vld [vmem:[%s1 + $0x8] sm:$0xf]
  %v29 = vld [vmem:[%s1 + $0xc] sm:$0xf]
  %v30 = vld [vmem:[%s2] sm:$0x1]
  %v32 = vlaneseq
  %v33 = vshrl.u32 %v32, 7
  %v34 = vsub.s32 0, %v33
  %v35 = vrot.slane %v30, %v34
  %v39 = vunpack.c.l.b16 %v24
  %v40 = vunpack.c.l.b16 %v25
  %v41 = vpack.c.b16 %v40, %v39
  %v46 = vunpack.c.l.b16 %v26
  %v47 = vunpack.c.l.b16 %v27
  %v48 = vunpack.c.l.b16 %v28
  %v49 = vunpack.c.l.b16 %v29
  %v50 = vpack.c.b16 %v47, %v46
  %v51 = vpack.c.b16 %v49, %v48
  %vm54 = vcmask 261120
  %v56 = vsel %vm54, %v41, 0
  %58 = vmatprep.subr.bf16.mxu0 0
  %59 = vmatpush1.bf16.msra.mxu0 %v50
  %60 = vmatprep.subr.bf16.mxu0 0
  %61 = vmatpush1.bf16.msra.mxu0 %v51
  %62 = vmatprep.subr.bf16.mxu0 0
  %63 = vmatpush1.bf16.msra.mxu0 0
  %64 = vmatprep.subr.bf16.mxu0 0
  %65 = vmatpush1.bf16.msra.mxu0 0
  %66 = vmatprep.subr.bf16.mxu0 0
  %67 = vmatpush1.bf16.msra.mxu0 0
  %68 = vmatprep.subr.bf16.mxu0 0
  %69 = vmatpush1.bf16.msra.mxu0 0
  %70 = vmatprep.subr.bf16.mxu0 0
  %71 = vmatpush1.bf16.msra.mxu0 0
  %72 = vmatprep.subr.bf16.mxu0 0
  %73 = vmatpush1.bf16.msra.mxu0 0
  %74 = vmatprep.subr.bf16.mxu0 0
  %75 = vmatpush1.bf16.msra.mxu0 0
  %76 = vmatprep.subr.bf16.mxu0 0
  %77 = vmatpush1.bf16.msra.mxu0 0
  %78 = vmatprep.subr.bf16.mxu0 0
  %79 = vmatpush1.bf16.msra.mxu0 0
  %80 = vmatprep.subr.bf16.mxu0 0
  %81 = vmatpush1.bf16.msra.mxu0 0
  %82 = vmatprep.subr.bf16.mxu0 0
  %83 = vmatpush1.bf16.msra.mxu0 0
  %84 = vmatprep.subr.bf16.mxu0 0
  %85 = vmatpush1.bf16.msra.mxu0 0
  %86 = vmatprep.subr.bf16.mxu0 0
  %87 = vmatpush1.bf16.msra.mxu0 0
  %88 = vmatprep.subr.bf16.mxu0 0
  %89 = vmatpush1.bf16.msra.mxu0 0
  %90 = vmatprep.mubr.bf16.mxu0 0
  %91 = vmatmul.mubr.bf16.gmra.mrb[0].mxu0 %v56
  %v92 = vpop.f32.mrb[0].mxu0
  %v93 = vadd.f32 %v35, %v92
  %v94 = vpop.f32.mrb[0].mxu0
  %v95 = vpop.f32.mrb[0].mxu0
  %v96 = vadd.f32 %v35, %v95
  %v97 = vpop.f32.mrb[0].mxu0
  %98 = vdwg.mxu0
  %v99 = vld [vmem:[%s3] sm:$0xf]
  %v100 = vld [vmem:[%s3 + $0x4] sm:$0xf]
  %v101 = vunpack.c.l.bf16 %v99
  %v102 = vunpack.c.l.bf16 %v100
  %v103 = vadd.f32 %v93, %v101
  %v104 = vadd.f32 %v96, %v102
  %v105 = vsel %vm54, %v103, 0.0
  %106 = vadd.xlane.f32.xlu0 %v105
  %v107 = vpop.xlane.xlu0 %106
  %v108 = vsel %vm54, %v104, 0.0
  %109 = vadd.xlane.f32.xlu0 %v108
  %v110 = vpop.xlane.xlu0 %109
  %v111 = vrcp.pop 32.0
  %v112 = vmul.f32 %v107, %v111
  %v113 = vmul.f32 %v110, %v111
  %v114 = vsub.f32 %v103, %v112
  %v115 = vsub.f32 %v104, %v113
  %v116 = vmul.f32 %v114, %v114
  %v117 = vmul.f32 %v115, %v115
  %v118 = vsel %vm54, %v116, 0.0
  %119 = vadd.xlane.f32.xlu0 %v118
  %v120 = vpop.xlane.xlu0 %119
  %v121 = vsel %vm54, %v117, 0.0
  %122 = vadd.xlane.f32.xlu0 %v121
  %v123 = vpop.xlane.xlu0 %122
  %v124 = vmul.f32 %v120, %v111
  %v125 = vmul.f32 %v123, %v111
  %v126 = vadd.f32 %v124, 1e-12
  %v127 = vadd.f32 %v125, 1e-12
  %v128 = vrsqrt.pop %v126
  %v129 = vrsqrt.pop %v127
  %v130 = vmul.f32 %v114, %v128
  %v131 = vmul.f32 %v115, %v129
  %v132 = vld [vmem:[%s4] sm:$0x1]
  %v134 = vlaneseq
  %v135 = vshrl.u32 %v134, 7
  %v136 = vsub.s32 0, %v135
  %v137 = vrot.slane %v132, %v136
  %v139 = vmul.f32 %v130, %v137
  %v140 = vmul.f32 %v131, %v137
  %v141 = vld [vmem:[%s5] sm:$0x1]
  %v143 = vlaneseq
  %v144 = vshrl.u32 %v143, 7
  %v145 = vsub.s32 0, %v144
  %v146 = vrot.slane %v141, %v145
  %v148 = vadd.f32 %v139, %v146
  %v149 = vadd.f32 %v140, %v146
  %v150 = vpack.c.bf16 %v149, %v148
  %v152 = vunpack.c.l.b16 %v150
  %v153 = vunpack.c.h.b16 %v150
  %v154 = vpack.c.b16 %v152, %v152
  %v155 = vpack.c.b16 %v153, %v153
  %vm158 = vcmask 257024
  %159 = vst.msk [vmem:[%s6] sm:$0xf] %vm158, %v154
  %160 = vst.msk [vmem:[%s6 + $0x4] sm:$0xf] %vm158, %v155
  // Predicated region
  $region26: #{behrt_forward.12} parent=0 // pred_check
    _
  $region27: #{behrt_forward.12} parent=0 // pred_check_branch
    %162 = sbr.rel (0) target = $region29
  $region28: #{behrt_forward.12} parent=0 // pred_region
    _
  $region29: #{behrt_forward.12} parent=0 // pred_fallthru
    _
  // Predicated region
  $region30: #{behrt_forward.12} parent=0 // pred_check
    _
  $region31: #{behrt_forward.12} parent=0 // pred_check_branch
    %164 = sbr.rel (0) target = $region33
  $region32: #{behrt_forward.12} parent=0 // pred_region
    _
  $region33: #{behrt_forward.12} parent=0 // pred_fallthru
    _

// kernel: behrt_forward.10
$region0: #{behrt_forward.10}
  #allocation0 [shape = 'u32[]', space=smem, size = 0x4, offset = 0x4, fixed_abs, tag = 'smem constant byte address 0x4 - core index']
  #allocation1 [shape = 'u32[144,128]{1,0:T(1,128)}', space=vmem, size = 0x12000, scoped, tag = 'internal scratch']
  %s0 = inlined_call_operand.vmem [shape: bf16[16,32], index: 0, kind: input, shape index: {}]
  %s1 = inlined_call_operand.vmem [shape: bf16[32,96], index: 1, kind: input, shape index: {}]
  %s2 = inlined_call_operand.vmem [shape: f32[1,96], index: 2, kind: input, shape index: {}]
  %s3 = inlined_call_operand.vmem [shape: bf16[3,16,32], index: 3, kind: output, shape index: {}]
  %s4 = sld [smem:[#allocation0]]
  $region22: #{behrt_forward.10} parent=0
    _
  %s6 = ssub.s32 1, %s4
  %s7 = scalar_select 0, %s6, %s4
  // Predicated region
  $region2: #{behrt_forward.10} parent=0 // pred_check
    _
  $region3: #{behrt_forward.10} parent=0 // pred_check_branch
    %9 = sbr.rel (0) target = $region5
  $region4: #{behrt_forward.10} parent=0 // pred_region
    _
  $region5: #{behrt_forward.10} parent=0 // pred_fallthru
    _
  // Predicated region
  $region6: #{behrt_forward.10} parent=0 // pred_check
    _
  $region7: #{behrt_forward.10} parent=0 // pred_check_branch
    %11 = sbr.rel (0) target = $region9
  $region8: #{behrt_forward.10} parent=0 // pred_region
    _
  $region9: #{behrt_forward.10} parent=0 // pred_fallthru
    _
  // Predicated region
  $region10: #{behrt_forward.10} parent=0 // pred_check
    _
  $region11: #{behrt_forward.10} parent=0 // pred_check_branch
    %13 = sbr.rel (0) target = $region13
  $region12: #{behrt_forward.10} parent=0 // pred_region
    _
  $region13: #{behrt_forward.10} parent=0 // pred_fallthru
    _
  %v15 = vld [vmem:[%s0] sm:$0xf]
  %v16 = vld [vmem:[%s0 + $0x4] sm:$0xf]
  %v17 = vld [vmem:[%s1] sm:$0xf]
  %v18 = vld [vmem:[%s1 + $0x4] sm:$0xf]
  %v19 = vld [vmem:[%s1 + $0x8] sm:$0xf]
  %v20 = vld [vmem:[%s1 + $0xc] sm:$0xf]
  %v21 = vld [vmem:[%s2] sm:$0x1]
  %v23 = vlaneseq
  %v24 = vshrl.u32 %v23, 7
  %v25 = vsub.s32 0, %v24
  %v26 = vrot.slane %v21, %v25
  %v30 = vunpack.c.l.b16 %v15
  %v31 = vunpack.c.l.b16 %v16
  %v32 = vpack.c.b16 %v31, %v30
  %v37 = vunpack.c.l.b16 %v17
  %v38 = vunpack.c.l.b16 %v18
  %v39 = vunpack.c.l.b16 %v19
  %v40 = vunpack.c.l.b16 %v20
  %v41 = vpack.c.b16 %v38, %v37
  %v42 = vpack.c.b16 %v40, %v39
  %vm45 = vcmask 261120
  %v47 = vsel %vm45, %v32, 0
  %49 = vmatprep.subr.bf16.mxu0 0
  %50 = vmatpush1.bf16.msra.mxu0 %v41
  %51 = vmatprep.subr.bf16.mxu0 0
  %52 = vmatpush1.bf16.msra.mxu0 %v42
  %53 = vmatprep.subr.bf16.mxu0 0
  %54 = vmatpush1.bf16.msra.mxu0 0
  %55 = vmatprep.subr.bf16.mxu0 0
  %56 = vmatpush1.bf16.msra.mxu0 0
  %57 = vmatprep.subr.bf16.mxu0 0
  %58 = vmatpush1.bf16.msra.mxu0 0
  %59 = vmatprep.subr.bf16.mxu0 0
  %60 = vmatpush1.bf16.msra.mxu0 0
  %61 = vmatprep.subr.bf16.mxu0 0
  %62 = vmatpush1.bf16.msra.mxu0 0
  %63 = vmatprep.subr.bf16.mxu0 0
  %64 = vmatpush1.bf16.msra.mxu0 0
  %65 = vmatprep.subr.bf16.mxu0 0
  %66 = vmatpush1.bf16.msra.mxu0 0
  %67 = vmatprep.subr.bf16.mxu0 0
  %68 = vmatpush1.bf16.msra.mxu0 0
  %69 = vmatprep.subr.bf16.mxu0 0
  %70 = vmatpush1.bf16.msra.mxu0 0
  %71 = vmatprep.subr.bf16.mxu0 0
  %72 = vmatpush1.bf16.msra.mxu0 0
  %73 = vmatprep.subr.bf16.mxu0 0
  %74 = vmatpush1.bf16.msra.mxu0 0
  %75 = vmatprep.subr.bf16.mxu0 0
  %76 = vmatpush1.bf16.msra.mxu0 0
  %77 = vmatprep.subr.bf16.mxu0 0
  %78 = vmatpush1.bf16.msra.mxu0 0
  %79 = vmatprep.subr.bf16.mxu0 0
  %80 = vmatpush1.bf16.msra.mxu0 0
  %81 = vmatprep.mubr.bf16.mxu0 0
  %82 = vmatmul.mubr.bf16.gmra.mrb[0].mxu0 %v47
  %v83 = vpop.f32.mrb[0].mxu0
  %v84 = vadd.f32 %v26, %v83
  %v85 = vpop.f32.mrb[0].mxu0
  %v86 = vpop.f32.mrb[0].mxu0
  %v87 = vadd.f32 %v26, %v86
  %v88 = vpop.f32.mrb[0].mxu0
  %89 = vdwg.mxu0
  %v90 = vpack.c.bf16 %v87, %v84
  %v92 = vunpack.c.l.b16 %v90
  %v93 = vunpack.c.h.b16 %v90
  %v94 = vpack.c.b16 %v92, %v92
  %v95 = vpack.c.b16 %v93, %v93
  %vm98 = vcmask 257024
  %99 = vst.msk [vmem:[%s3] sm:$0xf] %vm98, %v94
  %100 = vst.msk [vmem:[%s3 + $0x4] sm:$0xf] %vm98, %v95
  %101 = vrot.lane.b32.xlu0 %v94, 96
  %v102 = vpop.permute.xlu0 %101
  %103 = vrot.lane.b32.xlu0 %v95, 96
  %v104 = vpop.permute.xlu0 %103
  %s107 = scalar_lea.vmem %s3, 8
  %108 = vst.msk [vmem:[%s107] sm:$0xf] %vm98, %v102
  %109 = vst.msk [vmem:[%s107 + $0x4] sm:$0xf] %vm98, %v104
  %110 = vrot.lane.b32.xlu0 %v94, 64
  %v111 = vpop.permute.xlu0 %110
  %112 = vrot.lane.b32.xlu0 %v95, 64
  %v113 = vpop.permute.xlu0 %112
  %s116 = scalar_lea.vmem %s3, 16
  %117 = vst.msk [vmem:[%s116] sm:$0xf] %vm98, %v111
  %118 = vst.msk [vmem:[%s116 + $0x4] sm:$0xf] %vm98, %v113
  // Predicated region
  $region14: #{behrt_forward.10} parent=0 // pred_check
    _
  $region15: #{behrt_forward.10} parent=0 // pred_check_branch
    %120 = sbr.rel (0) target = $region17
  $region16: #{behrt_forward.10} parent=0 // pred_region
    _
  $region17: #{behrt_forward.10} parent=0 // pred_fallthru
    _
  // Predicated region
  $region18: #{behrt_forward.10} parent=0 // pred_check
    _
  $region19: #{behrt_forward.10} parent=0 // pred_check_branch
    %122 = sbr.rel (0) target = $region21
  $region20: #{behrt_forward.10} parent=0 // pred_region
    _
  $region21: #{behrt_forward.10} parent=0 // pred_fallthru
    _

// kernel: behrt_forward.11
$region0: #{behrt_forward.11}
  #allocation0 [shape = 'u32[]', space=smem, size = 0x4, offset = 0x4, fixed_abs, tag = 'smem constant byte address 0x4 - core index']
  #allocation1 [shape = 'u32[144,128]{1,0:T(1,128)}', space=vmem, size = 0x12000, scoped, tag = 'internal scratch']
  %s0 = inlined_call_operand.vmem [shape: bf16[3,2,8,32], index: 0, kind: input, shape index: {}, may-alias: {0,1,2}]
  %s1 = inlined_call_operand.vmem [shape: bf16[3,2,8,32], index: 1, kind: input, shape index: {}, may-alias: {0,1,2}]
  %s2 = inlined_call_operand.vmem [shape: bf16[3,2,8,32], index: 2, kind: input, shape index: {}, may-alias: {0,1,2}]
  %s3 = inlined_call_operand.vmem [shape: f32[2,1,8], index: 3, kind: input, shape index: {}]
  %s4 = inlined_call_operand.vmem [shape: bf16[2,8,32], index: 4, kind: output, shape index: {}]
  %s5 = sld [smem:[#allocation0]]
  $region49: #{behrt_forward.11} parent=0
    _
  %s7 = ssub.s32 1, %s5
  %s8 = scalar_select 0, %s7, %s5
  loop: start=0, step=1, limit=4
  $region2: #{behrt_forward.11} parent=0 // loop_pre_header
    _
  $region3: #{behrt_forward.11} parent=0 // loop_header
    %s10 = sphi 0, %s14
    %p11 = scmp.ge.s32.totalorder %s10, 4
    %s17 = sphi 0, %s29
    %s18 = sphi 0, %s25
    %s19 = sphi 0, %s17
    %s20 = sphi 0, %s18
    %s21 = sphi 0, %s19
    %s22 = sphi 0, %s20
    %s34 = sphi 0, %s36
    %s37 = sphi 0, %s34
    %s38 = sphi 0, %s37
    %s54 = sphi 0, %s38
    %s60 = sphi 0, %s62
    %s63 = sphi 0, %s60
    %s64 = sphi 0, %s63
    %s80 = sphi 0, %s64
    %s86 = sphi 0, %s88
    %s89 = sphi 0, %s86
    %s90 = sphi 0, %s89
    %s106 = sphi 0, %s90
    %s112 = sphi 0, %s114
    %s115 = sphi 0, %s112
    %s116 = sphi 0, %s115
    %s132 = sphi 0, %s116
    %s140 = sphi 0, %s142
    %s143 = sphi 0, %s140
    %s144 = sphi 0, %s143
    %s160 = sphi 0, %s144
  $region4: #{behrt_forward.11} parent=0 // loop_header_branch
    %13 = sbr.rel (%p11) target = $region8
  $region5: #{behrt_forward.11} parent=0 // loop_body
    %s15 = ssub.s32 %s10, 1
    %s16 = ssub.s32 %s10, 2
    %s23 = sadd.s32 1, %s18
    %p24 = scmp.ge.s32.totalorder %s23, 1
    %s25 = scalar_select %p24, 0, %s23
    %s26 = sadd.s32 1, %s17
    %s27 = scalar_select %p24, %s26, %s17
    %p28 = scmp.ge.s32.totalorder %s27, 2
    %s29 = scalar_select %p28, 0, %s27
    %s30 = ssub.s32 %s17, %s29
    %s31 = ssub.s32 %s18, %s25
    %s32 = sor.u32 %s30, %s31
    %p33 = scmp.eq.s32.totalorder %s32, 0
    %s35 = sadd.s32 %s34, 1
    %s36 = scalar_select %p33, %s34, %s35
    %p39 = pneg %p33
    %p40 = scmp.eq.s32.totalorder %s10, 1
    %p41 = por %p39, %p40
    %p42 = scmp.ne.s32.totalorder %s34, %s37
    %p43 = scmp.eq.s32.totalorder %s10, 0
    %p44 = por %p42, %p43
    %p45 = scmp.ne.s32.totalorder %s34, %s37
    %p46 = scmp.eq.s32.totalorder %s15, 1
    %p47 = por %p45, %p46
    %p48 = scmp.ne.s32.totalorder %s37, %s38
    %p49 = scmp.eq.s32.totalorder %s15, 0
    %p50 = por %p48, %p49
    %p51 = scmp.ne.s32.totalorder %s37, %s38
    %p52 = scmp.eq.s32.totalorder %s16, 1
    %p53 = por %p51, %p52
    %p55 = scmp.ne.s32.totalorder %s38, %s54
    %p56 = scmp.eq.s32.totalorder %s16, 0
    %p57 = por %p55, %p56
    %s58 = ssub.s32 %s17, %s29
    %p59 = scmp.eq.s32.totalorder %s58, 0
    %s61 = sadd.s32 %s60, 1
    %s62 = scalar_select %p59, %s60, %s61
    %p65 = pneg %p59
    %p66 = scmp.eq.s32.totalorder %s10, 1
    %p67 = por %p65, %p66
    %p68 = scmp.ne.s32.totalorder %s60, %s63
    %p69 = scmp.eq.s32.totalorder %s10, 0
    %p70 = por %p68, %p69
    %p71 = scmp.ne.s32.totalorder %s60, %s63
    %p72 = scmp.eq.s32.totalorder %s15, 1
    %p73 = por %p71, %p72
    %p74 = scmp.ne.s32.totalorder %s63, %s64
    %p75 = scmp.eq.s32.totalorder %s15, 0
    %p76 = por %p74, %p75
    %p77 = scmp.ne.s32.totalorder %s63, %s64
    %p78 = scmp.eq.s32.totalorder %s16, 1
    %p79 = por %p77, %p78
    %p81 = scmp.ne.s32.totalorder %s64, %s80
    %p82 = scmp.eq.s32.totalorder %s16, 0
    %p83 = por %p81, %p82
    %s84 = ssub.s32 %s17, %s29
    %p85 = scmp.eq.s32.totalorder %s84, 0
    %s87 = sadd.s32 %s86, 1
    %s88 = scalar_select %p85, %s86, %s87
    %p91 = pneg %p85
    %p92 = scmp.eq.s32.totalorder %s10, 1
    %p93 = por %p91, %p92
    %p94 = scmp.ne.s32.totalorder %s86, %s89
    %p95 = scmp.eq.s32.totalorder %s10, 0
    %p96 = por %p94, %p95
    %p97 = scmp.ne.s32.totalorder %s86, %s89
    %p98 = scmp.eq.s32.totalorder %s15, 1
    %p99 = por %p97, %p98
    %p100 = scmp.ne.s32.totalorder %s89, %s90
    %p101 = scmp.eq.s32.totalorder %s15, 0
    %p102 = por %p100, %p101
    %p103 = scmp.ne.s32.totalorder %s89, %s90
    %p104 = scmp.eq.s32.totalorder %s16, 1
    %p105 = por %p103, %p104
    %p107 = scmp.ne.s32.totalorder %s90, %s106
    %p108 = scmp.eq.s32.totalorder %s16, 0
    %p109 = por %p107, %p108
    %s110 = ssub.s32 %s17, %s29
    %p111 = scmp.eq.s32.totalorder %s110, 0
    %s113 = sadd.s32 %s112, 1
    %s114 = scalar_select %p111, %s112, %s113
    %p117 = pneg %p111
    %p118 = scmp.eq.s32.totalorder %s10, 1
    %p119 = por %p117, %p118
    %p120 = scmp.ne.s32.totalorder %s112, %s115
    %p121 = scmp.eq.s32.totalorder %s10, 0
    %p122 = por %p120, %p121
    %p123 = scmp.ne.s32.totalorder %s112, %s115
    %p124 = scmp.eq.s32.totalorder %s15, 1
    %p125 = por %p123, %p124
    %p126 = scmp.ne.s32.totalorder %s115, %s116
    %p127 = scmp.eq.s32.totalorder %s15, 0
    %p128 = por %p126, %p127
    %p129 = scmp.ne.s32.totalorder %s115, %s116
    %p130 = scmp.eq.s32.totalorder %s16, 1
    %p131 = por %p129, %p130
    %p133 = scmp.ne.s32.totalorder %s116, %s132
    %p134 = scmp.eq.s32.totalorder %s16, 0
    %p135 = por %p133, %p134
    %s136 = ssub.s32 %s17, %s29
    %s137 = ssub.s32 %s18, %s25
    %s138 = sor.u32 %s136, %s137
    %p139 = scmp.eq.s32.totalorder %s138, 0
    %s141 = sadd.s32 %s140, 1
    %s142 = scalar_select %p139, %s140, %s141
    %p145 = pneg %p139
    %p146 = scmp.eq.s32.totalorder %s10, 1
    %p147 = por %p145, %p146
    %p148 = scmp.ne.s32.totalorder %s140, %s143
    %p149 = scmp.eq.s32.totalorder %s10, 0
    %p150 = por %p148, %p149
    %p151 = scmp.ne.s32.totalorder %s140, %s143
    %p152 = scmp.eq.s32.totalorder %s15, 1
    %p153 = por %p151, %p152
    %p154 = scmp.ne.s32.totalorder %s143, %s144
    %p155 = scmp.eq.s32.totalorder %s15, 0
    %p156 = por %p154, %p155
    %p157 = scmp.ne.s32.totalorder %s143, %s144
    %p158 = scmp.eq.s32.totalorder %s16, 1
    %p159 = por %p157, %p158
    %p161 = scmp.ne.s32.totalorder %s144, %s160
    %p162 = scmp.eq.s32.totalorder %s16, 0
    %p163 = por %p161, %p162
    %p164 = scmp.le.s32.totalorder 1, %s10
    %p165 = scmp.lt.s32.totalorder %s10, 3
    %p166 = pnand %p164, %p165
    %p167 = pneg %p166
    // Predicated region
    $region9: #{behrt_forward.11} parent=5 // pred_check
      _
    $region10: #{behrt_forward.11} parent=5 // pred_check_branch
      %169 = sbr.rel (%p166) target = $region12
    $region11: #{behrt_forward.11} parent=5 // pred_region
      %s170 = ssub.s32 %s10, 1
    $region12: #{behrt_forward.11} parent=5 // pred_fallthru
      _
    %p171 = scmp.lt.s32.totalorder %s10, 2
    // Predicated region
    $region13: #{behrt_forward.11} parent=5 // pred_check
      %p172 = pneg %p171
    $region14: #{behrt_forward.11} parent=5 // pred_check_branch
      %174 = sbr.rel (%p172) target = $region16
    $region15: #{behrt_forward.11} parent=5 // pred_region
      // Predicated region
      $region17: #{behrt_forward.11} parent=15 // pred_check
        %p175 = pneg %p44
      $region18: #{behrt_forward.11} parent=15 // pred_check_branch
        %177 = sbr.rel (%p175) target = $region20
      $region19: #{behrt_forward.11} parent=15 // pred_region
        %p178 = scmp.lt.s32.totalorder %s17, 1
        %s179 = scalar_select %p178, %s17, 1
        %p180 = scmp.lt.s32.totalorder %s18, 0
        %s181 = scalar_select %p180, %s18, 0
        %s182 = sadd.s32 %s181, %s179
        %s183 = smul.addr %s182, 4
        %s184 = scalar_lea.vmem %s0, %s183
      $region20: #{behrt_forward.11} parent=15 // pred_fallthru
        _
      // Predicated region
      $region21: #{behrt_forward.11} parent=15 // pred_check
        %p185 = pneg %p70
      $region22: #{behrt_forward.11} parent=15 // pred_check_branch
        %187 = sbr.rel (%p185) target = $region24
      $region23: #{behrt_forward.11} parent=15 // pred_region
        %p188 = scmp.lt.s32.totalorder %s17, 1
        %s189 = scalar_select %p188, %s17, 1
        %s190 = sadd.s32 %s189, 2
        %s191 = smul.addr %s190, 4
        %s192 = scalar_lea.vmem %s1, %s191
      $region24: #{behrt_forward.11} parent=15 // pred_fallthru
        _
      // Predicated region
      $region25: #{behrt_forward.11} parent=15 // pred_check
        %p193 = pneg %p96
      $region26: #{behrt_forward.11} parent=15 // pred_check_branch
        %195 = sbr.rel (%p193) target = $region28
      $region27: #{behrt_forward.11} parent=15 // pred_region
        %p196 = scmp.lt.s32.totalorder %s17, 1
        %s197 = scalar_select %p196, %s17, 1
        %s198 = sadd.s32 %s197, 4
        %s199 = smul.addr %s198, 4
        %s200 = scalar_lea.vmem %s2, %s199
      $region28: #{behrt_forward.11} parent=15 // pred_fallthru
        _
      // Predicated region
      $region29: #{behrt_forward.11} parent=15 // pred_check
        %p201 = pneg %p122
      $region30: #{behrt_forward.11} parent=15 // pred_check_branch
        %203 = sbr.rel (%p201) target = $region32
      $region31: #{behrt_forward.11} parent=15 // pred_region
        %p204 = scmp.lt.s32.totalorder %s17, 1
        %s205 = scalar_select %p204, %s17, 1
        %s206 = scalar_lea.vmem %s3, %s205
      $region32: #{behrt_forward.11} parent=15 // pred_fallthru
        _
    $region16: #{behrt_forward.11} parent=5 // pred_fallthru
      _
    %p207 = scmp.le.s32.totalorder 1, %s10
    %p208 = scmp.lt.s32.totalorder %s10, 3
    %p209 = pnand %p207, %p208
    %p210 = pneg %p209
    // Predicated region
    $region33: #{behrt_forward.11} parent=5 // pred_check
      _
    $region34: #{behrt_forward.11} parent=5 // pred_check_branch
      %212 = sbr.rel (%p209) target = $region36
    $region35: #{behrt_forward.11} parent=5 // pred_region
      %s213 = ssub.s32 %s10, 1
      %p214 = scmp.lt.s32.totalorder %s19, 1
      %s215 = scalar_select %p214, %s19, 1
      %p216 = scmp.lt.s32.totalorder %s20, 0
      %s217 = scalar_select %p216, %s20, 0
      %s218 = sadd.s32 %s217, %s215
      %s219 = smul.addr %s218, 4
      %s220 = scalar_lea.vmem %s0, %s219
      %p221 = pneg %p50
      %p222 = pneg %p47
      %p223 = scmp.lt.s32.totalorder %s19, 1
      %s224 = scalar_select %p223, %s19, 1
      %s225 = sadd.s32 %s224, 2
      %s226 = smul.addr %s225, 4
      %s227 = scalar_lea.vmem %s1, %s226
      %p228 = pneg %p76
      %p229 = pneg %p73
      %p230 = scmp.lt.s32.totalorder %s19, 1
      %s231 = scalar_select %p230, %s19, 1
      %s232 = sadd.s32 %s231, 4
      %s233 = smul.addr %s232, 4
      %s234 = scalar_lea.vmem %s2, %s233
      %p235 = pneg %p102
      %p236 = pneg %p99
      %p237 = scmp.lt.s32.totalorder %s19, 1
      %s238 = scalar_select %p237, %s19, 1
      %s239 = scalar_lea.vmem %s3, %s238
      %p240 = pneg %p128
      %p241 = pneg %p125
      %p242 = pneg %p156
      %p243 = pneg %p153
      %p244 = scmp.lt.s32.totalorder %s19, 1
      %s245 = scalar_select %p244, %s19, 1
      %p246 = scmp.lt.s32.totalorder %s20, 0
      %s247 = scalar_select %p246, %s20, 0
      %s248 = sadd.s32 %s247, %s245
      %s249 = smul.addr %s248, 4
      %s250 = scalar_lea.vmem %s4, %s249
      %p251 = scmp.lt.s32.totalorder %s19, 1
      %s252 = scalar_select %p251, %s19, 1
      %p253 = scmp.lt.s32.totalorder %s20, 0
      %s254 = scalar_select %p253, %s20, 0
      %s255 = sadd.s32 %s254, %s252
      %s256 = smul.addr %s255, 4
      %s257 = scalar_lea.vmem %s0, %s256
      %p258 = scmp.lt.s32.totalorder %s19, 1
      %s259 = scalar_select %p258, %s19, 1
      %s260 = sadd.s32 %s259, 2
      %s261 = smul.addr %s260, 4
      %s262 = scalar_lea.vmem %s1, %s261
      %p263 = scmp.lt.s32.totalorder %s19, 1
      %s264 = scalar_select %p263, %s19, 1
      %s265 = sadd.s32 %s264, 4
      %s266 = smul.addr %s265, 4
      %s267 = scalar_lea.vmem %s2, %s266
      %p268 = scmp.lt.s32.totalorder %s19, 1
      %s269 = scalar_select %p268, %s19, 1
      %s270 = scalar_lea.vmem %s3, %s269
      %p271 = scmp.lt.s32.totalorder %s19, 1
      %s272 = scalar_select %p271, %s19, 1
      %p273 = scmp.lt.s32.totalorder %s20, 0
      %s274 = scalar_select %p273, %s20, 0
      %s275 = sadd.s32 %s274, %s272
      %s276 = smul.addr %s275, 4
      %s277 = scalar_lea.vmem %s4, %s276
      %v279 = vld [vmem:[%s257] sm:$0xf]
      %v280 = vld [vmem:[%s262] sm:$0xf]
      %v281 = vld [vmem:[%s267] sm:$0xf]
      %v282 = vld [vmem:[%s270] sm:$0x1]
      %v284 = vlaneseq
      %v285 = vshrl.u32 %v284, 7
      %v286 = vsub.s32 0, %v285
      %v287 = vrot.slane %v282, %v286
      %vm289 = vcmask 64512
      %v291 = vsel %vm289, %v279, 0
      %v294 = vsel %vm289, %v280, 0
      %296 = vmatprep.subr.bf16.mxu0 0
      %297 = vmatpush1.bf16.xpose.msra.mxu0 %v294
      %298 = vmatprep.subr.bf16.mxu0 0
      %299 = vmatpush1.bf16.xpose.msra.mxu0 0
      %300 = vmatprep.subr.bf16.mxu0 0
      %301 = vmatpush1.bf16.xpose.msra.mxu0 0
      %302 = vmatprep.subr.bf16.mxu0 0
      %303 = vmatpush1.bf16.xpose.msra.mxu0 0
      %304 = vmatprep.subr.bf16.mxu0 0
      %305 = vmatpush1.bf16.xpose.msra.mxu0 0
      %306 = vmatprep.subr.bf16.mxu0 0
      %307 = vmatpush1.bf16.xpose.msra.mxu0 0
      %308 = vmatprep.subr.bf16.mxu0 0
      %309 = vmatpush1.bf16.xpose.msra.mxu0 0
      %310 = vmatprep.subr.bf16.mxu0 0
      %311 = vmatpush1.bf16.xpose.msra.mxu0 0
      %312 = vmatprep.subr.bf16.mxu0 0
      %313 = vmatpush1.bf16.xpose.msra.mxu0 0
      %314 = vmatprep.subr.bf16.mxu0 0
      %315 = vmatpush1.bf16.xpose.msra.mxu0 0
      %316 = vmatprep.subr.bf16.mxu0 0
      %317 = vmatpush1.bf16.xpose.msra.mxu0 0
      %318 = vmatprep.subr.bf16.mxu0 0
      %319 = vmatpush1.bf16.xpose.msra.mxu0 0
      %320 = vmatprep.subr.bf16.mxu0 0
      %321 = vmatpush1.bf16.xpose.msra.mxu0 0
      %322 = vmatprep.subr.bf16.mxu0 0
      %323 = vmatpush1.bf16.xpose.msra.mxu0 0
      %324 = vmatprep.subr.bf16.mxu0 0
      %325 = vmatpush1.bf16.xpose.msra.mxu0 0
      %326 = vmatprep.subr.bf16.mxu0 0
      %327 = vmatpush1.bf16.xpose.msra.mxu0 0
      %328 = vmatprep.mubr.bf16.mxu0 0
      %329 = vmatmul.mubr.bf16.gmra.mrb[0].mxu0 %v291
      %v330 = vpop.f32.mrb[0].mxu0
      %v331 = vadd.f32 %v287, %v330
      %v332 = vpop.f32.mrb[0].mxu0
      %v333 = vpop.f32.mrb[0].mxu0
      %v334 = vpop.f32.mrb[0].mxu0
      %335 = vdwg.mxu0
      %v336 = vsel %vm289, %v331, -inf
      %337 = vmax.xlane.f32.xlu0 %v336
      %v338 = vpop.xlane.xlu0 %337
      %v339 = vsub.f32 %v331, %v338
      %v340 = vmul.f32 %v339, 1.442695
      %v341 = vpow.pop %v340
      %v342 = vsel %vm289, %v341, 0.0
      %343 = vadd.xlane.f32.xlu0 %v342
      %v344 = vpop.xlane.xlu0 %343
      %v345 = vpack.c.bf16 %v341, %v341
      %v347 = vsel %vm289, %v345, 0
      %vm349 = vcmask 1043456
      %v351 = vsel %vm349, %v281, 0
      %353 = vmatprep.subr.bf16.mxu0 0
      %354 = vmatpush1.bf16.msra.mxu0 %v351
      %355 = vmatprep.subr.bf16.mxu0 0
      %356 = vmatpush1.bf16.msra.mxu0 0
      %357 = vmatprep.subr.bf16.mxu0 0
      %358 = vmatpush1.bf16.msra.mxu0 0
      %359 = vmatprep.subr.bf16.mxu0 0
      %360 = vmatpush1.bf16.msra.mxu0 0
      %361 = vmatprep.subr.bf16.mxu0 0
      %362 = vmatpush1.bf16.msra.mxu0 0
      %363 = vmatprep.subr.bf16.mxu0 0
      %364 = vmatpush1.bf16.msra.mxu0 0
      %365 = vmatprep.subr.bf16.mxu0 0
      %366 = vmatpush1.bf16.msra.mxu0 0
      %367 = vmatprep.subr.bf16.mxu0 0
      %368 = vmatpush1.bf16.msra.mxu0 0
      %369 = vmatprep.subr.bf16.mxu0 0
      %370 = vmatpush1.bf16.msra.mxu0 0
      %371 = vmatprep.subr.bf16.mxu0 0
      %372 = vmatpush1.bf16.msra.mxu0 0
      %373 = vmatprep.subr.bf16.mxu0 0
      %374 = vmatpush1.bf16.msra.mxu0 0
      %375 = vmatprep.subr.bf16.mxu0 0
      %376 = vmatpush1.bf16.msra.mxu0 0
      %377 = vmatprep.subr.bf16.mxu0 0
      %378 = vmatpush1.bf16.msra.mxu0 0
      %379 = vmatprep.subr.bf16.mxu0 0
      %380 = vmatpush1.bf16.msra.mxu0 0
      %381 = vmatprep.subr.bf16.mxu0 0
      %382 = vmatpush1.bf16.msra.mxu0 0
      %383 = vmatprep.subr.bf16.mxu0 0
      %384 = vmatpush1.bf16.msra.mxu0 0
      %385 = vmatprep.mubr.bf16.mxu0 0
      %386 = vmatmul.mubr.bf16.gmra.mrb[0].mxu0 %v347
      %v387 = vpop.f32.mrb[0].mxu0
      %v388 = vadd.f32 0.0, %v387
      %v389 = vpop.f32.mrb[0].mxu0
      %v390 = vpop.f32.mrb[0].mxu0
      %v391 = vpop.f32.mrb[0].mxu0
      %392 = vdwg.mxu0
      %v393 = vrcp.pop %v344
      %v394 = vmul.f32 %v388, %v393
      %v395 = vpack.c.bf16 %v394, %v394
      %v397 = vunpack.c.l.b16 %v279
      %v398 = vpack.c.b16 %v397, %v397
      %399 = vrot.lane.b32.xlu0 %v398, 120
      %v400 = vpop.permute.xlu0 %399
      %v402 = vunpack.c.l.b16 %v280
      %v403 = vpack.c.b16 %v402, %v402
      %404 = vrot.lane.b32.xlu0 %v403, 120
      %v405 = vpop.permute.xlu0 %404
      %v407 = vsel %vm289, %v400, 0
      %v410 = vsel %vm289, %v405, 0
      %412 = vmatprep.subr.bf16.mxu0 0
      %413 = vmatpush1.bf16.xpose.msra.mxu0 %v410
      %414 = vmatprep.subr.bf16.mxu0 0
      %415 = vmatpush1.bf16.xpose.msra.mxu0 0
      %416 = vmatprep.subr.bf16.mxu0 0
      %417 = vmatpush1.bf16.xpose.msra.mxu0 0
      %418 = vmatprep.subr.bf16.mxu0 0
      %419 = vmatpush1.bf16.xpose.msra.mxu0 0
      %420 = vmatprep.subr.bf16.mxu0 0
      %421 = vmatpush1.bf16.xpose.msra.mxu0 0
      %422 = vmatprep.subr.bf16.mxu0 0
      %423 = vmatpush1.bf16.xpose.msra.mxu0 0
      %424 = vmatprep.subr.bf16.mxu0 0
      %425 = vmatpush1.bf16.xpose.msra.mxu0 0
      %426 = vmatprep.subr.bf16.mxu0 0
      %427 = vmatpush1.bf16.xpose.msra.mxu0 0
      %428 = vmatprep.subr.bf16.mxu0 0
      %429 = vmatpush1.bf16.xpose.msra.mxu0 0
      %430 = vmatprep.subr.bf16.mxu0 0
      %431 = vmatpush1.bf16.xpose.msra.mxu0 0
      %432 = vmatprep.subr.bf16.mxu0 0
      %433 = vmatpush1.bf16.xpose.msra.mxu0 0
      %434 = vmatprep.subr.bf16.mxu0 0
      %435 = vmatpush1.bf16.xpose.msra.mxu0 0
      %436 = vmatprep.subr.bf16.mxu0 0
      %437 = vmatpush1.bf16.xpose.msra.mxu0 0
      %438 = vmatprep.subr.bf16.mxu0 0
      %439 = vmatpush1.bf16.xpose.msra.mxu0 0
      %440 = vmatprep.subr.bf16.mxu0 0
      %441 = vmatpush1.bf16.xpose.msra.mxu0 0
      %442 = vmatprep.subr.bf16.mxu0 0
      %443 = vmatpush1.bf16.xpose.msra.mxu0 0
      %444 = vmatprep.mubr.bf16.mxu0 0
      %445 = vmatmul.mubr.bf16.gmra.mrb[0].mxu0 %v407
      %v446 = vpop.f32.mrb[0].mxu0
      %v447 = vadd.f32 %v287, %v446
      %v448 = vpop.f32.mrb[0].mxu0
      %v449 = vpop.f32.mrb[0].mxu0
      %v450 = vpop.f32.mrb[0].mxu0
      %451 = vdwg.mxu0
      %v452 = vsel %vm289, %v447, -inf
      %453 = vmax.xlane.f32.xlu0 %v452
      %v454 = vpop.xlane.xlu0 %453
      %v455 = vsub.f32 %v447, %v454
      %v456 = vmul.f32 %v455, 1.442695
      %v457 = vpow.pop %v456
      %v458 = vsel %vm289, %v457, 0.0
      %459 = vadd.xlane.f32.xlu0 %v458
      %v460 = vpop.xlane.xlu0 %459
      %v461 = vpack.c.bf16 %v457, %v457
      %v463 = vunpack.c.l.b16 %v281
      %v464 = vpack.c.b16 %v463, %v463
      %465 = vrot.lane.b32.xlu0 %v464, 120
      %v466 = vpop.permute.xlu0 %465
      %v468 = vsel %vm289, %v461, 0
      %v471 = vsel %vm349, %v466, 0
      %473 = vmatprep.subr.bf16.mxu0 0
      %474 = vmatpush1.bf16.msra.mxu0 %v471
      %475 = vmatprep.subr.bf16.mxu0 0
      %476 = vmatpush1.bf16.msra.mxu0 0
      %477 = vmatprep.subr.bf16.mxu0 0
      %478 = vmatpush1.bf16.msra.mxu0 0
      %479 = vmatprep.subr.bf16.mxu0 0
      %480 = vmatpush1.bf16.msra.mxu0 0
      %481 = vmatprep.subr.bf16.mxu0 0
      %482 = vmatpush1.bf16.msra.mxu0 0
      %483 = vmatprep.subr.bf16.mxu0 0
      %484 = vmatpush1.bf16.msra.mxu0 0
      %485 = vmatprep.subr.bf16.mxu0 0
      %486 = vmatpush1.bf16.msra.mxu0 0
      %487 = vmatprep.subr.bf16.mxu0 0
      %488 = vmatpush1.bf16.msra.mxu0 0
      %489 = vmatprep.subr.bf16.mxu0 0
      %490 = vmatpush1.bf16.msra.mxu0 0
      %491 = vmatprep.subr.bf16.mxu0 0
      %492 = vmatpush1.bf16.msra.mxu0 0
      %493 = vmatprep.subr.bf16.mxu0 0
      %494 = vmatpush1.bf16.msra.mxu0 0
      %495 = vmatprep.subr.bf16.mxu0 0
      %496 = vmatpush1.bf16.msra.mxu0 0
      %497 = vmatprep.subr.bf16.mxu0 0
      %498 = vmatpush1.bf16.msra.mxu0 0
      %499 = vmatprep.subr.bf16.mxu0 0
      %500 = vmatpush1.bf16.msra.mxu0 0
      %501 = vmatprep.subr.bf16.mxu0 0
      %502 = vmatpush1.bf16.msra.mxu0 0
      %503 = vmatprep.subr.bf16.mxu0 0
      %504 = vmatpush1.bf16.msra.mxu0 0
      %505 = vmatprep.mubr.bf16.mxu0 0
      %506 = vmatmul.mubr.bf16.gmra.mrb[0].mxu0 %v468
      %v507 = vpop.f32.mrb[0].mxu0
      %v508 = vadd.f32 0.0, %v507
      %v509 = vpop.f32.mrb[0].mxu0
      %v510 = vpop.f32.mrb[0].mxu0
      %v511 = vpop.f32.mrb[0].mxu0
      %512 = vdwg.mxu0
      %v513 = vrcp.pop %v460
      %v514 = vmul.f32 %v508, %v513
      %v515 = vpack.c.bf16 %v514, %v514
      %516 = vrot.lane.b32.xlu0 %v398, 112
      %v517 = vpop.permute.xlu0 %516
      %518 = vrot.lane.b32.xlu0 %v403, 112
      %v519 = vpop.permute.xlu0 %518
      %v521 = vsel %vm289, %v517, 0
      %v524 = vsel %vm289, %v519, 0
      %526 = vmatprep.subr.bf16.mxu0 0
      %527 = vmatpush1.bf16.xpose.msra.mxu0 %v524
      %528 = vmatprep.subr.bf16.mxu0 0
      %529 = vmatpush1.bf16.xpose.msra.mxu0 0
      %530 = vmatprep.subr.bf16.mxu0 0
      %531 = vmatpush1.bf16.xpose.msra.mxu0 0
      %532 = vmatprep.subr.bf16.mxu0 0
      %533 = vmatpush1.bf16.xpose.msra.mxu0 0
      %534 = vmatprep.subr.bf16.mxu0 0
      %535 = vmatpush1.bf16.xpose.msra.mxu0 0
      %536 = vmatprep.subr.bf16.mxu0 0
      %537 = vmatpush1.bf16.xpose.msra.mxu0 0
      %538 = vmatprep.subr.bf16.mxu0 0
      %539 = vmatpush1.bf16.xpose.msra.mxu0 0
      %540 = vmatprep.subr.bf16.mxu0 0
      %541 = vmatpush1.bf16.xpose.msra.mxu0 0
      %542 = vmatprep.subr.bf16.mxu0 0
      %543 = vmatpush1.bf16.xpose.msra.mxu0 0
      %544 = vmatprep.subr.bf16.mxu0 0
      %545 = vmatpush1.bf16.xpose.msra.mxu0 0
      %546 = vmatprep.subr.bf16.mxu0 0
      %547 = vmatpush1.bf16.xpose.msra.mxu0 0
      %548 = vmatprep.subr.bf16.mxu0 0
      %549 = vmatpush1.bf16.xpose.msra.mxu0 0
      %550 = vmatprep.subr.bf16.mxu0 0
      %551 = vmatpush1.bf16.xpose.msra.mxu0 0
      %552 = vmatprep.subr.bf16.mxu0 0
      %553 = vmatpush1.bf16.xpose.msra.mxu0 0
      %554 = vmatprep.subr.bf16.mxu0 0
      %555 = vmatpush1.bf16.xpose.msra.mxu0 0
      %556 = vmatprep.subr.bf16.mxu0 0
      %557 = vmatpush1.bf16.xpose.msra.mxu0 0
      %558 = vmatprep.mubr.bf16.mxu0 0
      %559 = vmatmul.mubr.bf16.gmra.mrb[0].mxu0 %v521
      %v560 = vpop.f32.mrb[0].mxu0
      %v561 = vadd.f32 %v287, %v560
      %v562 = vpop.f32.mrb[0].mxu0
      %v563 = vpop.f32.mrb[0].mxu0
      %v564 = vpop.f32.mrb[0].mxu0
      %565 = vdwg.mxu0
      %v566 = vsel %vm289, %v561, -inf
      %567 = vmax.xlane.f32.xlu0 %v566
      %v568 = vpop.xlane.xlu0 %567
      %v569 = vsub.f32 %v561, %v568
      %v570 = vmul.f32 %v569, 1.442695
      %v571 = vpow.pop %v570
      %v572 = vsel %vm289, %v571, 0.0
      %573 = vadd.xlane.f32.xlu0 %v572
      %v574 = vpop.xlane.xlu0 %573
      %v575 = vpack.c.bf16 %v571, %v571
      %576 = vrot.lane.b32.xlu0 %v464, 112
      %v577 = vpop.permute.xlu0 %576
      %v579 = vsel %vm289, %v575, 0
      %v582 = vsel %vm349, %v577, 0
      %584 = vmatprep.subr.bf16.mxu0 0
      %585 = vmatpush1.bf16.msra.mxu0 %v582
      %586 = vmatprep.subr.bf16.mxu0 0
      %587 = vmatpush1.bf16.msra.mxu0 0
      %588 = vmatprep.subr.bf16.mxu0 0
      %589 = vmatpush1.bf16.msra.mxu0 0
      %590 = vmatprep.subr.bf16.mxu0 0
      %591 = vmatpush1.bf16.msra.mxu0 0
      %592 = vmatprep.subr.bf16.mxu0 0
      %593 = vmatpush1.bf16.msra.mxu0 0
      %594 = vmatprep.subr.bf16.mxu0 0
      %595 = vmatpush1.bf16.msra.mxu0 0
      %596 = vmatprep.subr.bf16.mxu0 0
      %597 = vmatpush1.bf16.msra.mxu0 0
      %598 = vmatprep.subr.bf16.mxu0 0
      %599 = vmatpush1.bf16.msra.mxu0 0
      %600 = vmatprep.subr.bf16.mxu0 0
      %601 = vmatpush1.bf16.msra.mxu0 0
      %602 = vmatprep.subr.bf16.mxu0 0
      %603 = vmatpush1.bf16.msra.mxu0 0
      %604 = vmatprep.subr.bf16.mxu0 0
      %605 = vmatpush1.bf16.msra.mxu0 0
      %606 = vmatprep.subr.bf16.mxu0 0
      %607 = vmatpush1.bf16.msra.mxu0 0
      %608 = vmatprep.subr.bf16.mxu0 0
      %609 = vmatpush1.bf16.msra.mxu0 0
      %610 = vmatprep.subr.bf16.mxu0 0
      %611 = vmatpush1.bf16.msra.mxu0 0
      %612 = vmatprep.subr.bf16.mxu0 0
      %613 = vmatpush1.bf16.msra.mxu0 0
      %614 = vmatprep.subr.bf16.mxu0 0
      %615 = vmatpush1.bf16.msra.mxu0 0
      %616 = vmatprep.mubr.bf16.mxu0 0
      %617 = vmatmul.mubr.bf16.gmra.mrb[0].mxu0 %v579
      %v618 = vpop.f32.mrb[0].mxu0
      %v619 = vadd.f32 0.0, %v618
      %v620 = vpop.f32.mrb[0].mxu0
      %v621 = vpop.f32.mrb[0].mxu0
      %v622 = vpop.f32.mrb[0].mxu0
      %623 = vdwg.mxu0
      %v624 = vrcp.pop %v574
      %v625 = vmul.f32 %v619, %v624
      %v626 = vpack.c.bf16 %v625, %v625
      %627 = vrot.lane.b32.xlu0 %v398, 104
      %v628 = vpop.permute.xlu0 %627
      %629 = vrot.lane.b32.xlu0 %v403, 104
      %v630 = vpop.permute.xlu0 %629
      %v632 = vsel %vm289, %v628, 0
      %v635 = vsel %vm289, %v630, 0
      %637 = vmatprep.subr.bf16.mxu0 0
      %638 = vmatpush1.bf16.xpose.msra.mxu0 %v635
      %639 = vmatprep.subr.bf16.mxu0 0
      %640 = vmatpush1.bf16.xpose.msra.mxu0 0
      %641 = vmatprep.subr.bf16.mxu0 0
      %642 = vmatpush1.bf16.xpose.msra.mxu0 0
      %643 = vmatprep.subr.bf16.mxu0 0
      %644 = vmatpush1.bf16.xpose.msra.mxu0 0
      %645 = vmatprep.subr.bf16.mxu0 0
      %646 = vmatpush1.bf16.xpose.msra.mxu0 0
      %647 = vmatprep.subr.bf16.mxu0 0
      %648 = vmatpush1.bf16.xpose.msra.mxu0 0
      %649 = vmatprep.subr.bf16.mxu0 0
      %650 = vmatpush1.bf16.xpose.msra.mxu0 0
      %651 = vmatprep.subr.bf16.mxu0 0
      %652 = vmatpush1.bf16.xpose.msra.mxu0 0
      %653 = vmatprep.subr.bf16.mxu0 0
      %654 = vmatpush1.bf16.xpose.msra.mxu0 0
      %655 = vmatprep.subr.bf16.mxu0 0
      %656 = vmatpush1.bf16.xpose.msra.mxu0 0
      %657 = vmatprep.subr.bf16.mxu0 0
      %658 = vmatpush1.bf16.xpose.msra.mxu0 0
      %659 = vmatprep.subr.bf16.mxu0 0
      %660 = vmatpush1.bf16.xpose.msra.mxu0 0
      %661 = vmatprep.subr.bf16.mxu0 0
      %662 = vmatpush1.bf16.xpose.msra.mxu0 0
      %663 = vmatprep.subr.bf16.mxu0 0
      %664 = vmatpush1.bf16.xpose.msra.mxu0 0
      %665 = vmatprep.subr.bf16.mxu0 0
      %666 = vmatpush1.bf16.xpose.msra.mxu0 0
      %667 = vmatprep.subr.bf16.mxu0 0
      %668 = vmatpush1.bf16.xpose.msra.mxu0 0
      %669 = vmatprep.mubr.bf16.mxu0 0
      %670 = vmatmul.mubr.bf16.gmra.mrb[0].mxu0 %v632
      %v671 = vpop.f32.mrb[0].mxu0
      %v672 = vadd.f32 %v287, %v671
      %v673 = vpop.f32.mrb[0].mxu0
      %v674 = vpop.f32.mrb[0].mxu0
      %v675 = vpop.f32.mrb[0].mxu0
      %676 = vdwg.mxu0
      %v677 = vsel %vm289, %v672, -inf
      %678 = vmax.xlane.f32.xlu0 %v677
      %v679 = vpop.xlane.xlu0 %678
      %v680 = vsub.f32 %v672, %v679
      %v681 = vmul.f32 %v680, 1.442695
      %v682 = vpow.pop %v681
      %v683 = vsel %vm289, %v682, 0.0
      %684 = vadd.xlane.f32.xlu0 %v683
      %v685 = vpop.xlane.xlu0 %684
      %v686 = vpack.c.bf16 %v682, %v682
      %687 = vrot.lane.b32.xlu0 %v464, 104
      %v688 = vpop.permute.xlu0 %687
      %v690 = vsel %vm289, %v686, 0
      %v693 = vsel %vm349, %v688, 0
      %695 = vmatprep.subr.bf16.mxu0 0
      %696 = vmatpush1.bf16.msra.mxu0 %v693
      %697 = vmatprep.subr.bf16.mxu0 0
      %698 = vmatpush1.bf16.msra.mxu0 0
      %699 = vmatprep.subr.bf16.mxu0 0
      %700 = vmatpush1.bf16.msra.mxu0 0
      %701 = vmatprep.subr.bf16.mxu0 0
      %702 = vmatpush1.bf16.msra.mxu0 0
      %703 = vmatprep.subr.bf16.mxu0 0
      %704 = vmatpush1.bf16.msra.mxu0 0
      %705 = vmatprep.subr.bf16.mxu0 0
      %706 = vmatpush1.bf16.msra.mxu0 0
      %707 = vmatprep.subr.bf16.mxu0 0
      %708 = vmatpush1.bf16.msra.mxu0 0
      %709 = vmatprep.subr.bf16.mxu0 0
      %710 = vmatpush1.bf16.msra.mxu0 0
      %711 = vmatprep.subr.bf16.mxu0 0
      %712 = vmatpush1.bf16.msra.mxu0 0
      %713 = vmatprep.subr.bf16.mxu0 0
      %714 = vmatpush1.bf16.msra.mxu0 0
      %715 = vmatprep.subr.bf16.mxu0 0
      %716 = vmatpush1.bf16.msra.mxu0 0
      %717 = vmatprep.subr.bf16.mxu0 0
      %718 = vmatpush1.bf16.msra.mxu0 0
      %719 = vmatprep.subr.bf16.mxu0 0
      %720 = vmatpush1.bf16.msra.mxu0 0
      %721 = vmatprep.subr.bf16.mxu0 0
      %722 = vmatpush1.bf16.msra.mxu0 0
      %723 = vmatprep.subr.bf16.mxu0 0
      %724 = vmatpush1.bf16.msra.mxu0 0
      %725 = vmatprep.subr.bf16.mxu0 0
      %726 = vmatpush1.bf16.msra.mxu0 0
      %727 = vmatprep.mubr.bf16.mxu0 0
      %728 = vmatmul.mubr.bf16.gmra.mrb[0].mxu0 %v690
      %v729 = vpop.f32.mrb[0].mxu0
      %v730 = vadd.f32 0.0, %v729
      %v731 = vpop.f32.mrb[0].mxu0
      %v732 = vpop.f32.mrb[0].mxu0
      %v733 = vpop.f32.mrb[0].mxu0
      %734 = vdwg.mxu0
      %v735 = vrcp.pop %v685
      %v736 = vmul.f32 %v730, %v735
      %v737 = vpack.c.bf16 %v736, %v736
      %739 = vrot.lane.b32.xlu0 %v515, 8
      %v740 = vpop.permute.xlu0 %739
      %742 = vrot.lane.b32.xlu0 %v626, 16
      %v743 = vpop.permute.xlu0 %742
      %745 = vrot.lane.b32.xlu0 %v737, 24
      %v746 = vpop.permute.xlu0 %745
      %v749 = vsel %vm289, %v395, %v740
      %vm750 = vcmask 130048
      %v752 = vsel %vm750, %v749, %v743
      %vm753 = vcmask 195584
      %v755 = vsel %vm753, %v752, %v746
      %vm757 = vcmask 257024
      %758 = vst.msk [vmem:[%s277] sm:$0xf] %vm757, %v755
      %p759 = scmp.lt.s32.totalorder %s19, 1
      %s760 = scalar_select %p759, %s19, 1
      %p761 = scmp.lt.s32.totalorder %s20, 0
      %s762 = scalar_select %p761, %s20, 0
      %s763 = sadd.s32 %s762, %s760
      %s764 = smul.addr %s763, 4
      %s765 = scalar_lea.vmem %s4, %s764
      // Predicated region
      $region37: #{behrt_forward.11} parent=35 // pred_check
        %p766 = pneg %p153
      $region38: #{behrt_forward.11} parent=35 // pred_check_branch
        %768 = sbr.rel (%p766) target = $region40
      $region39: #{behrt_forward.11} parent=35 // pred_region
        _
      $region40: #{behrt_forward.11} parent=35 // pred_fallthru
        _
    $region36: #{behrt_forward.11} parent=5 // pred_fallthru
      _
    %p769 = scmp.le.s32.totalorder 2, %s10
    // Predicated region
    $region41: #{behrt_forward.11} parent=5 // pred_check
      %p770 = pneg %p769
    $region42: #{behrt_forward.11} parent=5 // pred_check_branch
      %772 = sbr.rel (%p770) target = $region44
    $region43: #{behrt_forward.11} parent=5 // pred_region
      %s773 = ssub.s32 %s10, 2
      // Predicated region
      $region45: #{behrt_forward.11} parent=43 // pred_check
        %p774 = pneg %p159
      $region46: #{behrt_forward.11} parent=43 // pred_check_branch
        %776 = sbr.rel (%p774) target = $region48
      $region47: #{behrt_forward.11} parent=43 // pred_region
        %p777 = scmp.lt.s32.totalorder %s21, 1
        %s778 = scalar_select %p777, %s21, 1
        %p779 = scmp.lt.s32.totalorder %s22, 0
        %s780 = scalar_select %p779, %s22, 0
        %s781 = sadd.s32 %s780, %s778
        %s782 = smul.addr %s781, 4
        %s783 = scalar_lea.vmem %s4, %s782
      $region48: #{behrt_forward.11} parent=43 // pred_fallthru
        _
    $region44: #{behrt_forward.11} parent=5 // pred_fallthru
      _
  $region6: #{behrt_forward.11} parent=0 // loop_footer
    %s14 = sadd.s32 1, %s10
  $region7: #{behrt_forward.11} parent=0 // loop_footer_branch
    %9 = sbr.rel target = $region3
  $region8: #{behrt_forward.11} parent=0 // loop_exit
    _

// kernel: behrt_forward.13
$region0: #{behrt_forward.13}
  #allocation0 [shape = 'u32[]', space=smem, size = 0x4, offset = 0x4, fixed_abs, tag = 'smem constant byte address 0x4 - core index']
  #allocation1 [shape = 'u32[144,128]{1,0:T(1,128)}', space=vmem, size = 0x12000, scoped, tag = 'internal scratch']
  %s0 = inlined_call_operand.vmem [shape: bf16[16,32], index: 0, kind: input, shape index: {}]
  %s1 = inlined_call_operand.vmem [shape: bf16[32,128], index: 1, kind: input, shape index: {}]
  %s2 = inlined_call_operand.vmem [shape: f32[1,128], index: 2, kind: input, shape index: {}]
  %s3 = inlined_call_operand.vmem [shape: bf16[128,32], index: 3, kind: input, shape index: {}]
  %s4 = inlined_call_operand.vmem [shape: f32[1,32], index: 4, kind: input, shape index: {}]
  %s5 = inlined_call_operand.vmem [shape: f32[1,32], index: 5, kind: input, shape index: {}]
  %s6 = inlined_call_operand.vmem [shape: f32[1,32], index: 6, kind: input, shape index: {}]
  %s7 = inlined_call_operand.vmem [shape: bf16[16,32], index: 7, kind: output, shape index: {}]
  %s8 = sld [smem:[#allocation0]]
  $region38: #{behrt_forward.13} parent=0
    _
  %s10 = ssub.s32 1, %s8
  %s11 = scalar_select 0, %s10, %s8
  // Predicated region
  $region2: #{behrt_forward.13} parent=0 // pred_check
    _
  $region3: #{behrt_forward.13} parent=0 // pred_check_branch
    %13 = sbr.rel (0) target = $region5
  $region4: #{behrt_forward.13} parent=0 // pred_region
    _
  $region5: #{behrt_forward.13} parent=0 // pred_fallthru
    _
  // Predicated region
  $region6: #{behrt_forward.13} parent=0 // pred_check
    _
  $region7: #{behrt_forward.13} parent=0 // pred_check_branch
    %15 = sbr.rel (0) target = $region9
  $region8: #{behrt_forward.13} parent=0 // pred_region
    _
  $region9: #{behrt_forward.13} parent=0 // pred_fallthru
    _
  // Predicated region
  $region10: #{behrt_forward.13} parent=0 // pred_check
    _
  $region11: #{behrt_forward.13} parent=0 // pred_check_branch
    %17 = sbr.rel (0) target = $region13
  $region12: #{behrt_forward.13} parent=0 // pred_region
    _
  $region13: #{behrt_forward.13} parent=0 // pred_fallthru
    _
  // Predicated region
  $region14: #{behrt_forward.13} parent=0 // pred_check
    _
  $region15: #{behrt_forward.13} parent=0 // pred_check_branch
    %19 = sbr.rel (0) target = $region17
  $region16: #{behrt_forward.13} parent=0 // pred_region
    _
  $region17: #{behrt_forward.13} parent=0 // pred_fallthru
    _
  // Predicated region
  $region18: #{behrt_forward.13} parent=0 // pred_check
    _
  $region19: #{behrt_forward.13} parent=0 // pred_check_branch
    %21 = sbr.rel (0) target = $region21
  $region20: #{behrt_forward.13} parent=0 // pred_region
    _
  $region21: #{behrt_forward.13} parent=0 // pred_fallthru
    _
  // Predicated region
  $region22: #{behrt_forward.13} parent=0 // pred_check
    _
  $region23: #{behrt_forward.13} parent=0 // pred_check_branch
    %23 = sbr.rel (0) target = $region25
  $region24: #{behrt_forward.13} parent=0 // pred_region
    _
  $region25: #{behrt_forward.13} parent=0 // pred_fallthru
    _
  // Predicated region
  $region26: #{behrt_forward.13} parent=0 // pred_check
    _
  $region27: #{behrt_forward.13} parent=0 // pred_check_branch
    %25 = sbr.rel (0) target = $region29
  $region28: #{behrt_forward.13} parent=0 // pred_region
    _
  $region29: #{behrt_forward.13} parent=0 // pred_fallthru
    _
  %v27 = vld [vmem:[%s0] sm:$0xf]
  %v28 = vld [vmem:[%s0 + $0x4] sm:$0xf]
  %v29 = vld [vmem:[%s1] sm:$0xf]
  %v30 = vld [vmem:[%s1 + $0x4] sm:$0xf]
  %v31 = vld [vmem:[%s1 + $0x8] sm:$0xf]
  %v32 = vld [vmem:[%s1 + $0xc] sm:$0xf]
  %v33 = vld [vmem:[%s2] sm:$0x1]
  %v35 = vlaneseq
  %v36 = vshrl.u32 %v35, 7
  %v37 = vsub.s32 0, %v36
  %v38 = vrot.slane %v33, %v37
  %v42 = vunpack.c.l.b16 %v27
  %v43 = vunpack.c.l.b16 %v28
  %v44 = vpack.c.b16 %v43, %v42
  %v49 = vunpack.c.l.b16 %v29
  %v50 = vunpack.c.l.b16 %v30
  %v51 = vunpack.c.l.b16 %v31
  %v52 = vunpack.c.l.b16 %v32
  %v53 = vpack.c.b16 %v50, %v49
  %v54 = vpack.c.b16 %v52, %v51
  %vm57 = vcmask 261120
  %v59 = vsel %vm57, %v44, 0
  %61 = vmatprep.subr.bf16.mxu0 0
  %62 = vmatpush1.bf16.msra.mxu0 %v53
  %63 = vmatprep.subr.bf16.mxu0 0
  %64 = vmatpush1.bf16.msra.mxu0 %v54
  %65 = vmatprep.subr.bf16.mxu0 0
  %66 = vmatpush1.bf16.msra.mxu0 0
  %67 = vmatprep.subr.bf16.mxu0 0
  %68 = vmatpush1.bf16.msra.mxu0 0
  %69 = vmatprep.subr.bf16.mxu0 0
  %70 = vmatpush1.bf16.msra.mxu0 0
  %71 = vmatprep.subr.bf16.mxu0 0
  %72 = vmatpush1.bf16.msra.mxu0 0
  %73 = vmatprep.subr.bf16.mxu0 0
  %74 = vmatpush1.bf16.msra.mxu0 0
  %75 = vmatprep.subr.bf16.mxu0 0
  %76 = vmatpush1.bf16.msra.mxu0 0
  %77 = vmatprep.subr.bf16.mxu0 0
  %78 = vmatpush1.bf16.msra.mxu0 0
  %79 = vmatprep.subr.bf16.mxu0 0
  %80 = vmatpush1.bf16.msra.mxu0 0
  %81 = vmatprep.subr.bf16.mxu0 0
  %82 = vmatpush1.bf16.msra.mxu0 0
  %83 = vmatprep.subr.bf16.mxu0 0
  %84 = vmatpush1.bf16.msra.mxu0 0
  %85 = vmatprep.subr.bf16.mxu0 0
  %86 = vmatpush1.bf16.msra.mxu0 0
  %87 = vmatprep.subr.bf16.mxu0 0
  %88 = vmatpush1.bf16.msra.mxu0 0
  %89 = vmatprep.subr.bf16.mxu0 0
  %90 = vmatpush1.bf16.msra.mxu0 0
  %91 = vmatprep.subr.bf16.mxu0 0
  %92 = vmatpush1.bf16.msra.mxu0 0
  %93 = vmatprep.mubr.bf16.mxu0 0
  %94 = vmatmul.mubr.bf16.gmra.mrb[0].mxu0 %v59
  %v95 = vpop.f32.mrb[0].mxu0
  %v96 = vadd.f32 %v38, %v95
  %v97 = vpop.f32.mrb[0].mxu0
  %v98 = vpop.f32.mrb[0].mxu0
  %v99 = vadd.f32 %v38, %v98
  %v100 = vpop.f32.mrb[0].mxu0
  %101 = vdwg.mxu0
  %v102 = vmul.f32 %v96, 0.5
  %v103 = vmul.f32 %v99, 0.5
  %v104 = vmul.f32 %v96, 0.70710677
  %v105 = vmul.f32 %v99, 0.70710677
  %v106 = verf.f32.pop %v104
  %v107 = verf.f32.pop %v105
  %v108 = vadd.f32 %v106, 1.0
  %v109 = vadd.f32 %v107, 1.0
  %v110 = vmul.f32 %v102, %v108
  %v111 = vmul.f32 %v103, %v109
  %v112 = vpack.c.bf16 %v111, %v110
  %v113 = vld [vmem:[%s3] sm:$0xf]
  %v114 = vld [vmem:[%s3 + $0x4] sm:$0xf]
  %v115 = vld [vmem:[%s3 + $0x8] sm:$0xf]
  %v116 = vld [vmem:[%s3 + $0xc] sm:$0xf]
  %v117 = vld [vmem:[%s3 + $0x10] sm:$0xf]
  %v118 = vld [vmem:[%s3 + $0x14] sm:$0xf]
  %v119 = vld [vmem:[%s3 + $0x18] sm:$0xf]
  %v120 = vld [vmem:[%s3 + $0x1c] sm:$0xf]
  %v121 = vld [vmem:[%s3 + $0x20] sm:$0xf]
  %v122 = vld [vmem:[%s3 + $0x24] sm:$0xf]
  %v123 = vld [vmem:[%s3 + $0x28] sm:$0xf]
  %v124 = vld [vmem:[%s3 + $0x2c] sm:$0xf]
  %v125 = vld [vmem:[%s3 + $0x30] sm:$0xf]
  %v126 = vld [vmem:[%s3 + $0x34] sm:$0xf]
  %v127 = vld [vmem:[%s3 + $0x38] sm:$0xf]
  %v128 = vld [vmem:[%s3 + $0x3c] sm:$0xf]
  %v129 = vld [vmem:[%s4] sm:$0x1]
  %v131 = vlaneseq
  %v132 = vshrl.u32 %v131, 7
  %v133 = vsub.s32 0, %v132
  %v134 = vrot.slane %v129, %v133
  %v152 = vunpack.c.l.b16 %v113
  %v153 = vunpack.c.l.b16 %v114
  %v154 = vunpack.c.l.b16 %v115
  %v155 = vunpack.c.l.b16 %v116
  %v156 = vunpack.c.l.b16 %v117
  %v157 = vunpack.c.l.b16 %v118
  %v158 = vunpack.c.l.b16 %v119
  %v159 = vunpack.c.l.b16 %v120
  %v160 = vunpack.c.l.b16 %v121
  %v161 = vunpack.c.l.b16 %v122
  %v162 = vunpack.c.l.b16 %v123
  %v163 = vunpack.c.l.b16 %v124
  %v164 = vunpack.c.l.b16 %v125
  %v165 = vunpack.c.l.b16 %v126
  %v166 = vunpack.c.l.b16 %v127
  %v167 = vunpack.c.l.b16 %v128
  %v168 = vpack.c.b16 %v153, %v152
  %v169 = vpack.c.b16 %v155, %v154
  %v170 = vpack.c.b16 %v157, %v156
  %v171 = vpack.c.b16 %v159, %v158
  %v172 = vpack.c.b16 %v161, %v160
  %v173 = vpack.c.b16 %v163, %v162
  %v174 = vpack.c.b16 %v165, %v164
  %v175 = vpack.c.b16 %v167, %v166
  %184 = vmatprep.subr.bf16.mxu0 0
  %185 = vmatpush1.bf16.msra.mxu0 %v168
  %186 = vmatprep.subr.bf16.mxu0 0
  %187 = vmatpush1.bf16.msra.mxu0 %v169
  %188 = vmatprep.subr.bf16.mxu0 0
  %189 = vmatpush1.bf16.msra.mxu0 %v170
  %190 = vmatprep.subr.bf16.mxu0 0
  %191 = vmatpush1.bf16.msra.mxu0 %v171
  %192 = vmatprep.subr.bf16.mxu0 0
  %193 = vmatpush1.bf16.msra.mxu0 %v172
  %194 = vmatprep.subr.bf16.mxu0 0
  %195 = vmatpush1.bf16.msra.mxu0 %v173
  %196 = vmatprep.subr.bf16.mxu0 0
  %197 = vmatpush1.bf16.msra.mxu0 %v174
  %198 = vmatprep.subr.bf16.mxu0 0
  %199 = vmatpush1.bf16.msra.mxu0 %v175
  %200 = vmatprep.subr.bf16.mxu0 0
  %201 = vmatpush1.bf16.msra.mxu0 0
  %202 = vmatprep.subr.bf16.mxu0 0
  %203 = vmatpush1.bf16.msra.mxu0 0
  %204 = vmatprep.subr.bf16.mxu0 0
  %205 = vmatpush1.bf16.msra.mxu0 0
  %206 = vmatprep.subr.bf16.mxu0 0
  %207 = vmatpush1.bf16.msra.mxu0 0
  %208 = vmatprep.subr.bf16.mxu0 0
  %209 = vmatpush1.bf16.msra.mxu0 0
  %210 = vmatprep.subr.bf16.mxu0 0
  %211 = vmatpush1.bf16.msra.mxu0 0
  %212 = vmatprep.subr.bf16.mxu0 0
  %213 = vmatpush1.bf16.msra.mxu0 0
  %214 = vmatprep.subr.bf16.mxu0 0
  %215 = vmatpush1.bf16.msra.mxu0 0
  %216 = vmatprep.mubr.bf16.mxu0 0
  %217 = vmatmul.mubr.bf16.gmra.mrb[0].mxu0 %v112
  %v218 = vpop.f32.mrb[0].mxu0
  %v219 = vadd.f32 %v134, %v218
  %v220 = vpop.f32.mrb[0].mxu0
  %v221 = vpop.f32.mrb[0].mxu0
  %v222 = vadd.f32 %v134, %v221
  %v223 = vpop.f32.mrb[0].mxu0
  %224 = vdwg.mxu0
  %v225 = vunpack.c.l.bf16 %v27
  %v226 = vunpack.c.l.bf16 %v28
  %v227 = vadd.f32 %v219, %v225
  %v228 = vadd.f32 %v222, %v226
  %v229 = vsel %vm57, %v227, 0.0
  %230 = vadd.xlane.f32.xlu0 %v229
  %v231 = vpop.xlane.xlu0 %230
  %v232 = vsel %vm57, %v228, 0.0
  %233 = vadd.xlane.f32.xlu0 %v232
  %v234 = vpop.xlane.xlu0 %233
  %v235 = vrcp.pop 32.0
  %v236 = vmul.f32 %v231, %v235
  %v237 = vmul.f32 %v234, %v235
  %v238 = vsub.f32 %v227, %v236
  %v239 = vsub.f32 %v228, %v237
  %v240 = vmul.f32 %v238, %v238
  %v241 = vmul.f32 %v239, %v239
  %v242 = vsel %vm57, %v240, 0.0
  %243 = vadd.xlane.f32.xlu0 %v242
  %v244 = vpop.xlane.xlu0 %243
  %v245 = vsel %vm57, %v241, 0.0
  %246 = vadd.xlane.f32.xlu0 %v245
  %v247 = vpop.xlane.xlu0 %246
  %v248 = vmul.f32 %v244, %v235
  %v249 = vmul.f32 %v247, %v235
  %v250 = vadd.f32 %v248, 1e-12
  %v251 = vadd.f32 %v249, 1e-12
  %v252 = vrsqrt.pop %v250
  %v253 = vrsqrt.pop %v251
  %v254 = vmul.f32 %v238, %v252
  %v255 = vmul.f32 %v239, %v253
  %v256 = vld [vmem:[%s5] sm:$0x1]
  %v258 = vlaneseq
  %v259 = vshrl.u32 %v258, 7
  %v260 = vsub.s32 0, %v259
  %v261 = vrot.slane %v256, %v260
  %v263 = vmul.f32 %v254, %v261
  %v264 = vmul.f32 %v255, %v261
  %v265 = vld [vmem:[%s6] sm:$0x1]
  %v267 = vlaneseq
  %v268 = vshrl.u32 %v267, 7
  %v269 = vsub.s32 0, %v268
  %v270 = vrot.slane %v265, %v269
  %v272 = vadd.f32 %v263, %v270
  %v273 = vadd.f32 %v264, %v270
  %v274 = vpack.c.bf16 %v273, %v272
  %v276 = vunpack.c.l.b16 %v274
  %v277 = vunpack.c.h.b16 %v274
  %v278 = vpack.c.b16 %v276, %v276
  %v279 = vpack.c.b16 %v277, %v277
  %vm282 = vcmask 257024
  %283 = vst.msk [vmem:[%s7] sm:$0xf] %vm282, %v278
  %284 = vst.msk [vmem:[%s7 + $0x4] sm:$0xf] %vm282, %v279
  // Predicated region
  $region30: #{behrt_forward.13} parent=0 // pred_check
    _
  $region31: #{behrt_forward.13} parent=0 // pred_check_branch
    %286 = sbr.rel (0) target = $region33
  $region32: #{behrt_forward.13} parent=0 // pred_region
    _
  $region33: #{behrt_forward.13} parent=0 // pred_fallthru
    _
  // Predicated region
  $region34: #{behrt_forward.13} parent=0 // pred_check
    _
  $region35: #{behrt_forward.13} parent=0 // pred_check_branch
    %288 = sbr.rel (0) target = $region37
  $region36: #{behrt_forward.13} parent=0 // pred_region
    _
  $region37: #{behrt_forward.13} parent=0 // pred_fallthru
    _

</llo_original>
